<compile_context>
chip_gen: v7x
topology: tpu7x:2x2x1
jax: 0.10.0
libtpu: 0.0.40
codegen_flags: <defaults>
</compile_context>

<pallas_src>
import jax
import jax.numpy as jnp
from jax.experimental import pallas as pl
from jax.experimental.pallas import tpu as pltpu

# ---- model dimensions --------------------------------------------------------
INPUT_DIM = 32
OUTPUT_DIM = 3
H1, H2, H3, H4 = 128, 256, 128, 64

OUT_PAD = 8   # output columns zero-padded 3 -> 8 (block last dim == full array dim)


# ---- kernel ------------------------------------------------------------------
def _mlp_kernel(x_ref,
                w1_ref, b1_ref,
                w2_ref, b2_ref,
                w3_ref, b3_ref,
                w4_ref, b4_ref,
                w5_ref, b5_ref,
                out_ref):
    """Fused 5-layer MLP on one (block_m, INPUT_DIM) batch tile.

    Matmul operands are bf16 (full-rate MXU on v5e/v6e/v7x), accumulated in
    f32; bias add / ReLU / sigmoid run in f32 on the VPU/EUP. Dropout is
    identity (eval mode). Everything stays resident in VMEM.
    """
    def dense_relu(h_bf16, w_ref, b_ref):
        acc = jnp.dot(h_bf16, w_ref[...], preferred_element_type=jnp.float32)
        return jnp.maximum(acc + b_ref[...], 0.0).astype(jnp.bfloat16)

    h = x_ref[...]                       # (block_m, 32) bf16
    h = dense_relu(h, w1_ref, b1_ref)    # (block_m, 128)
    h = dense_relu(h, w2_ref, b2_ref)    # (block_m, 256)
    h = dense_relu(h, w3_ref, b3_ref)    # (block_m, 128)
    h = dense_relu(h, w4_ref, b4_ref)    # (block_m, 64)

    # Layer 5: Linear + Sigmoid. Output padded to OUT_PAD columns; padded
    # columns hold sigmoid(0)=0.5 garbage and are sliced away in the wrapper.
    y = jnp.dot(h, w5_ref[...], preferred_element_type=jnp.float32) + b5_ref[...]
    out_ref[...] = jax.nn.sigmoid(y).astype(out_ref.dtype)


# ---- one-time parameter preparation ------------------------------------------
def prepare_params(params):
    """Hoists all padding / bf16 casts out of the per-call forward wrapper.

    Input params: f32 weights stored (in_features, out_features) and (1, out)
    biases. Returns device-ready bf16 weights (w5/b5 padded to OUT_PAD columns)
    and f32 biases.
    """
    prepared = {
        "w1": params["w1"].astype(jnp.bfloat16),          # (32, 128)
        "b1": params["b1"].astype(jnp.float32),
        "w2": params["w2"].astype(jnp.bfloat16),          # (128, 256)
        "b2": params["b2"].astype(jnp.float32),
        "w3": params["w3"].astype(jnp.bfloat16),          # (256, 128)
        "b3": params["b3"].astype(jnp.float32),
        "w4": params["w4"].astype(jnp.bfloat16),          # (128, 64)
        "b4": params["b4"].astype(jnp.float32),
    }
    w5 = jnp.zeros((H4, OUT_PAD), jnp.bfloat16)
    w5 = w5.at[:, :OUTPUT_DIM].set(params["w5"].astype(jnp.bfloat16))
    b5 = jnp.zeros((1, OUT_PAD), jnp.float32)
    b5 = b5.at[:, :OUTPUT_DIM].set(params["b5"].astype(jnp.float32))
    prepared["w5"], prepared["b5"] = w5, b5
    return jax.tree_util.tree_map(jnp.asarray, prepared)


# ---- forward wrapper ----------------------------------------------------------
def civil_engineering_nn_forward(x, prepared, *, block_m=1024):
    """x: (batch, INPUT_DIM) float32. prepared: output of prepare_params().

    block_m: batch tile (multiple of 8; sweep 512/1024/2048). It is clamped so
    the grid keeps >= 2 steps, letting the "parallel" batch axis shard across
    both v7x TensorCores. The batch is padded to a tile multiple only if needed.
    """
    batch, input_dim = x.shape
    assert input_dim == INPUT_DIM
    assert block_m % 8 == 0

    # Clamp tile so grid >= 2 steps (v7x megacore), rounded to a multiple of 8.
    half = -(-batch // 2)                       # ceil(batch / 2)
    half = ((half + 7) // 8) * 8
    bm = max(8, min(block_m, half))
    padded_batch = ((batch + bm - 1) // bm) * bm
    grid = (padded_batch // bm,)

    # Only cast: no feature padding (x is read at K=32 inside the kernel).
    x_bf = x.astype(jnp.bfloat16)
    if padded_batch != batch:
        x_bf = jnp.pad(x_bf, ((0, padded_batch - batch), (0, 0)))

    w1, b1 = prepared["w1"], prepared["b1"]
    w2, b2 = prepared["w2"], prepared["b2"]
    w3, b3 = prepared["w3"], prepared["b3"]
    w4, b4 = prepared["w4"], prepared["b4"]
    w5, b5 = prepared["w5"], prepared["b5"]

    def full_spec(shape):
        # Whole weight/bias resident every step (constant index_map).
        return pl.BlockSpec(shape, lambda i: (0, 0))

    out = pl.pallas_call(
        _mlp_kernel,
        out_shape=jax.ShapeDtypeStruct((padded_batch, OUT_PAD), jnp.bfloat16),
        grid_spec=pltpu.PrefetchScalarGridSpec(
            num_scalar_prefetch=0,
            grid=grid,
            in_specs=[
                pl.BlockSpec((bm, INPUT_DIM), lambda i: (i, 0)),   # x tile, K=32
                full_spec(w1.shape), full_spec(b1.shape),
                full_spec(w2.shape), full_spec(b2.shape),
                full_spec(w3.shape), full_spec(b3.shape),
                full_spec(w4.shape), full_spec(b4.shape),
                full_spec(w5.shape), full_spec(b5.shape),
            ],
            out_specs=pl.BlockSpec((bm, OUT_PAD), lambda i: (i, 0)),
        ),
        compiler_params=pltpu.CompilerParams(
            dimension_semantics=("parallel",)),  # shards batch across TCs on v7x
    )(x_bf, w1, b1, w2, b2, w3, b3, w4, b4, w5, b5)

    return out[:batch, :OUTPUT_DIM]   # bf16; caller may cast to f32


# ---- deterministic parameter init --------------------------------------------
def init_params(key):
    """nn.Linear-style fan-in-scaled uniform init. Weights stored (in, out), f32."""
    dims = [(INPUT_DIM, H1), (H1, H2), (H2, H3), (H3, H4), (H4, OUTPUT_DIM)]
    params = {}
    keys = jax.random.split(key, 2 * len(dims))
    for idx, (fan_in, fan_out) in enumerate(dims):
        bound = 1.0 / jnp.sqrt(fan_in)
        params[f"w{idx + 1}"] = jax.random.uniform(
            keys[2 * idx], (fan_in, fan_out),
            minval=-bound, maxval=bound, dtype=jnp.float32)
        params[f"b{idx + 1}"] = jax.random.uniform(
            keys[2 * idx + 1], (1, fan_out),
            minval=-bound, maxval=bound, dtype=jnp.float32)
    return params


# ---- pure-JAX f32 reference ----------------------------------------------------
def reference_forward(x, params):
    h = x
    for i in range(1, 5):
        h = jnp.maximum(h @ params[f"w{i}"] + params[f"b{i}"], 0.0)
    y = h @ params["w5"] + params["b5"]
    return jax.nn.sigmoid(y)


if __name__ == "__main__":
    key = jax.random.PRNGKey(0)
    pkey, xkey = jax.random.split(key)

    params = init_params(pkey)
    prepared = prepare_params(params)

    batch = 256  # block_m clamps to 128 -> 2 grid steps (both v7x TCs active)
    x = jax.random.normal(xkey, (batch, INPUT_DIM), dtype=jnp.float32)

    out = civil_engineering_nn_forward(x, prepared, block_m=1024)
    out = jax.block_until_ready(out)

    ref = reference_forward(x, params)
    assert out.shape == (batch, OUTPUT_DIM)
    out_f32 = out.astype(jnp.float32)
    assert jnp.all(jnp.isfinite(out_f32))
    # bf16 matmul operands + bf16 output vs f32 reference: sigmoid outputs in
    # [0,1] agree to ~1e-2; 3e-2 tolerance.
    assert jnp.max(jnp.abs(out_f32 - ref)) < 3e-2, "mismatch vs f32 reference"

    print("KERNEL_OK")
</pallas_src>

<mosaic_0001>
module attributes {stable_mosaic.version = 11 : i64} {
  func.func @_mlp_kernel(%arg0: i32, %arg1: memref<128x32xbf16, #tpu.memory_space<vmem>>, %arg2: memref<32x128xbf16, #tpu.memory_space<vmem>>, %arg3: memref<1x128xf32, #tpu.memory_space<vmem>>, %arg4: memref<128x256xbf16, #tpu.memory_space<vmem>>, %arg5: memref<1x256xf32, #tpu.memory_space<vmem>>, %arg6: memref<256x128xbf16, #tpu.memory_space<vmem>>, %arg7: memref<1x128xf32, #tpu.memory_space<vmem>>, %arg8: memref<128x64xbf16, #tpu.memory_space<vmem>>, %arg9: memref<1x64xf32, #tpu.memory_space<vmem>>, %arg10: memref<64x8xbf16, #tpu.memory_space<vmem>>, %arg11: memref<1x8xf32, #tpu.memory_space<vmem>>, %arg12: memref<128x8xbf16, #tpu.memory_space<vmem>>) attributes {dimension_semantics = [#tpu.dimension_semantics<parallel>], iteration_bounds = array<i64: 2>, scalar_prefetch = 0 : i64, scratch_operands = 0 : i64, tpu.core_type = #tpu.core_type<tc>, window_params = [{transform_indices = @transform_0, window_bounds = array<i64: 128, 32>}, {pipeline_mode = #tpu.pipeline_mode<synchronous>, transform_indices = @transform_1, window_bounds = array<i64: 32, 128>}, {pipeline_mode = #tpu.pipeline_mode<synchronous>, transform_indices = @transform_2, window_bounds = array<i64: 1, 128>}, {pipeline_mode = #tpu.pipeline_mode<synchronous>, transform_indices = @transform_3, window_bounds = array<i64: 128, 256>}, {pipeline_mode = #tpu.pipeline_mode<synchronous>, transform_indices = @transform_4, window_bounds = array<i64: 1, 256>}, {pipeline_mode = #tpu.pipeline_mode<synchronous>, transform_indices = @transform_5, window_bounds = array<i64: 256, 128>}, {pipeline_mode = #tpu.pipeline_mode<synchronous>, transform_indices = @transform_6, window_bounds = array<i64: 1, 128>}, {pipeline_mode = #tpu.pipeline_mode<synchronous>, transform_indices = @transform_7, window_bounds = array<i64: 128, 64>}, {pipeline_mode = #tpu.pipeline_mode<synchronous>, transform_indices = @transform_8, window_bounds = array<i64: 1, 64>}, {pipeline_mode = #tpu.pipeline_mode<synchronous>, transform_indices = @transform_9, window_bounds = array<i64: 64, 8>}, {pipeline_mode = #tpu.pipeline_mode<synchronous>, transform_indices = @transform_10, window_bounds = array<i64: 1, 8>}, {transform_indices = @transform_11, window_bounds = array<i64: 128, 8>}]} {
    %c0 = arith.constant 0 : index
    %c0_0 = arith.constant 0 : index
    %0 = vector.load %arg1[%c0, %c0_0] : memref<128x32xbf16, #tpu.memory_space<vmem>>, vector<128x32xbf16>
    %c0_1 = arith.constant 0 : index
    %c0_2 = arith.constant 0 : index
    %1 = vector.load %arg2[%c0_1, %c0_2] : memref<32x128xbf16, #tpu.memory_space<vmem>>, vector<32x128xbf16>
    %cst = arith.constant dense<0.000000e+00> : vector<128x128xf32>
    %2 = tpu.matmul %0, %1, %cst {dimension_numbers = #tpu.dot_dimension_numbers<[1], [0], [0], [1], [0, 0, 1, 1], [], []>} : vector<128x32xbf16>, vector<32x128xbf16>, vector<128x128xf32> -> vector<128x128xf32>
    %c0_3 = arith.constant 0 : index
    %c0_4 = arith.constant 0 : index
    %3 = vector.load %arg3[%c0_3, %c0_4] : memref<1x128xf32, #tpu.memory_space<vmem>>, vector<1x128xf32>
    %4 = vector.broadcast %3 : vector<1x128xf32> to vector<128x128xf32>
    %5 = arith.addf %2, %4 : vector<128x128xf32>
    %cst_5 = arith.constant 0.000000e+00 : f32
    %6 = vector.broadcast %cst_5 : f32 to vector<128x128xf32>
    %7 = arith.maximumf %5, %6 : vector<128x128xf32>
    %8 = arith.truncf %7 : vector<128x128xf32> to vector<128x128xbf16>
    %c0_6 = arith.constant 0 : index
    %c0_7 = arith.constant 0 : index
    %9 = vector.load %arg4[%c0_6, %c0_7] : memref<128x256xbf16, #tpu.memory_space<vmem>>, vector<128x256xbf16>
    %cst_8 = arith.constant dense<0.000000e+00> : vector<128x256xf32>
    %10 = tpu.matmul %8, %9, %cst_8 {dimension_numbers = #tpu.dot_dimension_numbers<[1], [0], [0], [1], [0, 0, 1, 1], [], []>} : vector<128x128xbf16>, vector<128x256xbf16>, vector<128x256xf32> -> vector<128x256xf32>
    %c0_9 = arith.constant 0 : index
    %c0_10 = arith.constant 0 : index
    %11 = vector.load %arg5[%c0_9, %c0_10] : memref<1x256xf32, #tpu.memory_space<vmem>>, vector<1x256xf32>
    %12 = vector.broadcast %11 : vector<1x256xf32> to vector<128x256xf32>
    %13 = arith.addf %10, %12 : vector<128x256xf32>
    %cst_11 = arith.constant 0.000000e+00 : f32
    %14 = vector.broadcast %cst_11 : f32 to vector<128x256xf32>
    %15 = arith.maximumf %13, %14 : vector<128x256xf32>
    %16 = arith.truncf %15 : vector<128x256xf32> to vector<128x256xbf16>
    %c0_12 = arith.constant 0 : index
    %c0_13 = arith.constant 0 : index
    %17 = vector.load %arg6[%c0_12, %c0_13] : memref<256x128xbf16, #tpu.memory_space<vmem>>, vector<256x128xbf16>
    %cst_14 = arith.constant dense<0.000000e+00> : vector<128x128xf32>
    %18 = tpu.matmul %16, %17, %cst_14 {dimension_numbers = #tpu.dot_dimension_numbers<[1], [0], [0], [1], [0, 0, 1, 1], [], []>} : vector<128x256xbf16>, vector<256x128xbf16>, vector<128x128xf32> -> vector<128x128xf32>
    %c0_15 = arith.constant 0 : index
    %c0_16 = arith.constant 0 : index
    %19 = vector.load %arg7[%c0_15, %c0_16] : memref<1x128xf32, #tpu.memory_space<vmem>>, vector<1x128xf32>
    %20 = vector.broadcast %19 : vector<1x128xf32> to vector<128x128xf32>
    %21 = arith.addf %18, %20 : vector<128x128xf32>
    %cst_17 = arith.constant 0.000000e+00 : f32
    %22 = vector.broadcast %cst_17 : f32 to vector<128x128xf32>
    %23 = arith.maximumf %21, %22 : vector<128x128xf32>
    %24 = arith.truncf %23 : vector<128x128xf32> to vector<128x128xbf16>
    %c0_18 = arith.constant 0 : index
    %c0_19 = arith.constant 0 : index
    %25 = vector.load %arg8[%c0_18, %c0_19] : memref<128x64xbf16, #tpu.memory_space<vmem>>, vector<128x64xbf16>
    %cst_20 = arith.constant dense<0.000000e+00> : vector<128x64xf32>
    %26 = tpu.matmul %24, %25, %cst_20 {dimension_numbers = #tpu.dot_dimension_numbers<[1], [0], [0], [1], [0, 0, 1, 1], [], []>} : vector<128x128xbf16>, vector<128x64xbf16>, vector<128x64xf32> -> vector<128x64xf32>
    %c0_21 = arith.constant 0 : index
    %c0_22 = arith.constant 0 : index
    %27 = vector.load %arg9[%c0_21, %c0_22] : memref<1x64xf32, #tpu.memory_space<vmem>>, vector<1x64xf32>
    %28 = vector.broadcast %27 : vector<1x64xf32> to vector<128x64xf32>
    %29 = arith.addf %26, %28 : vector<128x64xf32>
    %cst_23 = arith.constant 0.000000e+00 : f32
    %30 = vector.broadcast %cst_23 : f32 to vector<128x64xf32>
    %31 = arith.maximumf %29, %30 : vector<128x64xf32>
    %32 = arith.truncf %31 : vector<128x64xf32> to vector<128x64xbf16>
    %c0_24 = arith.constant 0 : index
    %c0_25 = arith.constant 0 : index
    %33 = vector.load %arg10[%c0_24, %c0_25] : memref<64x8xbf16, #tpu.memory_space<vmem>>, vector<64x8xbf16>
    %cst_26 = arith.constant dense<0.000000e+00> : vector<128x8xf32>
    %34 = tpu.matmul %32, %33, %cst_26 {dimension_numbers = #tpu.dot_dimension_numbers<[1], [0], [0], [1], [0, 0, 1, 1], [], []>} : vector<128x64xbf16>, vector<64x8xbf16>, vector<128x8xf32> -> vector<128x8xf32>
    %c0_27 = arith.constant 0 : index
    %c0_28 = arith.constant 0 : index
    %35 = vector.load %arg11[%c0_27, %c0_28] : memref<1x8xf32, #tpu.memory_space<vmem>>, vector<1x8xf32>
    %36 = vector.broadcast %35 : vector<1x8xf32> to vector<128x8xf32>
    %37 = arith.addf %34, %36 : vector<128x8xf32>
    %38 = arith.negf %37 : vector<128x8xf32>
    %39 = math.exp %38 : vector<128x8xf32>
    %cst_29 = arith.constant 1.000000e+00 : f32
    %40 = vector.broadcast %cst_29 : f32 to vector<128x8xf32>
    %41 = arith.addf %40, %39 : vector<128x8xf32>
    %42 = arith.divf %40, %41 : vector<128x8xf32>
    %43 = arith.truncf %42 : vector<128x8xf32> to vector<128x8xbf16>
    %c0_30 = arith.constant 0 : index
    %c0_31 = arith.constant 0 : index
    %44 = vector.load %arg12[%c0_30, %c0_31] : memref<128x8xbf16, #tpu.memory_space<vmem>>, vector<128x8xbf16>
    tpu.vector_store %arg12[%c0_30, %c0_31], %43 {strides = array<i32>} : memref<128x8xbf16, #tpu.memory_space<vmem>>, vector<128x8xbf16>,
    return
  }
  func.func @transform_0(%arg0: i32) -> (i32, i32) {
    %c0_i32 = arith.constant 0 : i32
    %c0_i32_0 = arith.constant 0 : i32
    return %arg0, %c0_i32 : i32, i32
  }
  func.func @transform_1(%arg0: i32) -> (i32, i32) {
    %c0_i32 = arith.constant 0 : i32
    %c0_i32_0 = arith.constant 0 : i32
    %c0_i32_1 = arith.constant 0 : i32
    return %c0_i32, %c0_i32_0 : i32, i32
  }
  func.func @transform_2(%arg0: i32) -> (i32, i32) {
    %c0_i32 = arith.constant 0 : i32
    %c0_i32_0 = arith.constant 0 : i32
    %c0_i32_1 = arith.constant 0 : i32
    return %c0_i32, %c0_i32_0 : i32, i32
  }
  func.func @transform_3(%arg0: i32) -> (i32, i32) {
    %c0_i32 = arith.constant 0 : i32
    %c0_i32_0 = arith.constant 0 : i32
    %c0_i32_1 = arith.constant 0 : i32
    return %c0_i32, %c0_i32_0 : i32, i32
  }
  func.func @transform_4(%arg0: i32) -> (i32, i32) {
    %c0_i32 = arith.constant 0 : i32
    %c0_i32_0 = arith.constant 0 : i32
    %c0_i32_1 = arith.constant 0 : i32
    return %c0_i32, %c0_i32_0 : i32, i32
  }
  func.func @transform_5(%arg0: i32) -> (i32, i32) {
    %c0_i32 = arith.constant 0 : i32
    %c0_i32_0 = arith.constant 0 : i32
    %c0_i32_1 = arith.constant 0 : i32
    return %c0_i32, %c0_i32_0 : i32, i32
  }
  func.func @transform_6(%arg0: i32) -> (i32, i32) {
    %c0_i32 = arith.constant 0 : i32
    %c0_i32_0 = arith.constant 0 : i32
    %c0_i32_1 = arith.constant 0 : i32
    return %c0_i32, %c0_i32_0 : i32, i32
  }
  func.func @transform_7(%arg0: i32) -> (i32, i32) {
    %c0_i32 = arith.constant 0 : i32
    %c0_i32_0 = arith.constant 0 : i32
    %c0_i32_1 = arith.constant 0 : i32
    return %c0_i32, %c0_i32_0 : i32, i32
  }
  func.func @transform_8(%arg0: i32) -> (i32, i32) {
    %c0_i32 = arith.constant 0 : i32
    %c0_i32_0 = arith.constant 0 : i32
    %c0_i32_1 = arith.constant 0 : i32
    return %c0_i32, %c0_i32_0 : i32, i32
  }
  func.func @transform_9(%arg0: i32) -> (i32, i32) {
    %c0_i32 = arith.constant 0 : i32
    %c0_i32_0 = arith.constant 0 : i32
    %c0_i32_1 = arith.constant 0 : i32
    return %c0_i32, %c0_i32_0 : i32, i32
  }
  func.func @transform_10(%arg0: i32) -> (i32, i32) {
    %c0_i32 = arith.constant 0 : i32
    %c0_i32_0 = arith.constant 0 : i32
    %c0_i32_1 = arith.constant 0 : i32
    return %c0_i32, %c0_i32_0 : i32, i32
  }
  func.func @transform_11(%arg0: i32) -> (i32, i32) {
    %c0_i32 = arith.constant 0 : i32
    %c0_i32_0 = arith.constant 0 : i32
    return %arg0, %c0_i32 : i32, i32
  }
}

</mosaic_0001>

<llo_original>
// kernel: tpu_custom_call.1
$region0: #{tpu_custom_call.1}
  #allocation0 [shape = 'u32[]', space=smem, size = 0x4, offset = 0x4, fixed_abs, tag = 'smem constant byte address 0x4 - core index']
  #allocation1 [shape = 'u32[144,128]{1,0:T(1,128)}', space=vmem, size = 0x12000, scoped, tag = 'internal scratch']
  %s0 = inlined_call_operand.vmem [shape: bf16[256,32], index: 0, kind: input, shape index: {}]
  %s1 = inlined_call_operand.vmem [shape: bf16[32,128], index: 1, kind: input, shape index: {}]
  %s2 = inlined_call_operand.vmem [shape: f32[1,128], index: 2, kind: input, shape index: {}]
  %s3 = inlined_call_operand.vmem [shape: bf16[128,256], index: 3, kind: input, shape index: {}]
  %s4 = inlined_call_operand.vmem [shape: f32[1,256], index: 4, kind: input, shape index: {}]
  %s5 = inlined_call_operand.vmem [shape: bf16[256,128], index: 5, kind: input, shape index: {}]
  %s6 = inlined_call_operand.vmem [shape: f32[1,128], index: 6, kind: input, shape index: {}]
  %s7 = inlined_call_operand.vmem [shape: bf16[128,64], index: 7, kind: input, shape index: {}]
  %s8 = inlined_call_operand.vmem [shape: f32[1,64], index: 8, kind: input, shape index: {}]
  %s9 = inlined_call_operand.vmem [shape: bf16[64,8], index: 9, kind: input, shape index: {}]
  %s10 = inlined_call_operand.vmem [shape: f32[1,8], index: 10, kind: input, shape index: {}]
  %s11 = inlined_call_operand.vmem [shape: bf16[256,8], index: 11, kind: output, shape index: {}]
  %s12 = sld [smem:[#allocation0]]
  $region77: #{tpu_custom_call.1} parent=0
    _
  %s14 = ssub.s32 1, %s12
  %s15 = scalar_select 0, %s14, %s12
  loop: start=0, step=1, limit=4
  $region2: #{tpu_custom_call.1} parent=0 // loop_pre_header
    _
  $region3: #{tpu_custom_call.1} parent=0 // loop_header
    %s17 = sphi 0, %s21
    %p18 = scmp.ge.s32.totalorder %s17, 4
    %s27 = sphi 0, %s29
    %s30 = sphi 0, %s27
    %s31 = sphi 0, %s30
    %s47 = sphi 0, %s31
    %s51 = sphi 0, %s51
    %s53 = sphi 0, %s51
    %s54 = sphi 0, %s53
    %s68 = sphi 0, %s54
    %s72 = sphi 0, %s72
    %s74 = sphi 0, %s72
    %s75 = sphi 0, %s74
    %s89 = sphi 0, %s75
    %s93 = sphi 0, %s93
    %s95 = sphi 0, %s93
    %s96 = sphi 0, %s95
    %s110 = sphi 0, %s96
    %s114 = sphi 0, %s114
    %s116 = sphi 0, %s114
    %s117 = sphi 0, %s116
    %s131 = sphi 0, %s117
    %s135 = sphi 0, %s135
    %s137 = sphi 0, %s135
    %s138 = sphi 0, %s137
    %s152 = sphi 0, %s138
    %s156 = sphi 0, %s156
    %s158 = sphi 0, %s156
    %s159 = sphi 0, %s158
    %s173 = sphi 0, %s159
    %s177 = sphi 0, %s177
    %s179 = sphi 0, %s177
    %s180 = sphi 0, %s179
    %s194 = sphi 0, %s180
    %s198 = sphi 0, %s198
    %s200 = sphi 0, %s198
    %s201 = sphi 0, %s200
    %s215 = sphi 0, %s201
    %s219 = sphi 0, %s219
    %s221 = sphi 0, %s219
    %s222 = sphi 0, %s221
    %s236 = sphi 0, %s222
    %s240 = sphi 0, %s240
    %s242 = sphi 0, %s240
    %s243 = sphi 0, %s242
    %s257 = sphi 0, %s243
    %s263 = sphi 0, %s265
    %s266 = sphi 0, %s263
    %s267 = sphi 0, %s266
    %s283 = sphi 0, %s267
  $region4: #{tpu_custom_call.1} parent=0 // loop_header_branch
    %20 = sbr.rel (%p18) target = $region8
  $region5: #{tpu_custom_call.1} parent=0 // loop_body
    %s22 = ssub.s32 %s17, 1
    %s23 = ssub.s32 %s17, 2
    %s24 = sadd.s32 %s17, 1
    %s25 = ssub.s32 %s17, %s24
    %p26 = scmp.eq.s32.totalorder %s25, 0
    %s28 = sadd.s32 %s27, 1
    %s29 = scalar_select %p26, %s27, %s28
    %p32 = pneg %p26
    %p33 = scmp.eq.s32.totalorder %s17, 1
    %p34 = por %p32, %p33
    %p35 = scmp.ne.s32.totalorder %s27, %s30
    %p36 = scmp.eq.s32.totalorder %s17, 0
    %p37 = por %p35, %p36
    %p38 = scmp.ne.s32.totalorder %s27, %s30
    %p39 = scmp.eq.s32.totalorder %s22, 1
    %p40 = por %p38, %p39
    %p41 = scmp.ne.s32.totalorder %s30, %s31
    %p42 = scmp.eq.s32.totalorder %s22, 0
    %p43 = por %p41, %p42
    %p44 = scmp.ne.s32.totalorder %s30, %s31
    %p45 = scmp.eq.s32.totalorder %s23, 1
    %p46 = por %p44, %p45
    %p48 = scmp.ne.s32.totalorder %s31, %s47
    %p49 = scmp.eq.s32.totalorder %s23, 0
    %p50 = por %p48, %p49
    %s52 = sadd.s32 %s51, 1
    %p55 = scmp.eq.s32.totalorder %s17, 1
    %p56 = scmp.ne.s32.totalorder %s51, %s53
    %p57 = scmp.eq.s32.totalorder %s17, 0
    %p58 = por %p56, %p57
    %p59 = scmp.ne.s32.totalorder %s51, %s53
    %p60 = scmp.eq.s32.totalorder %s22, 1
    %p61 = por %p59, %p60
    %p62 = scmp.ne.s32.totalorder %s53, %s54
    %p63 = scmp.eq.s32.totalorder %s22, 0
    %p64 = por %p62, %p63
    %p65 = scmp.ne.s32.totalorder %s53, %s54
    %p66 = scmp.eq.s32.totalorder %s23, 1
    %p67 = por %p65, %p66
    %p69 = scmp.ne.s32.totalorder %s54, %s68
    %p70 = scmp.eq.s32.totalorder %s23, 0
    %p71 = por %p69, %p70
    %s73 = sadd.s32 %s72, 1
    %p76 = scmp.eq.s32.totalorder %s17, 1
    %p77 = scmp.ne.s32.totalorder %s72, %s74
    %p78 = scmp.eq.s32.totalorder %s17, 0
    %p79 = por %p77, %p78
    %p80 = scmp.ne.s32.totalorder %s72, %s74
    %p81 = scmp.eq.s32.totalorder %s22, 1
    %p82 = por %p80, %p81
    %p83 = scmp.ne.s32.totalorder %s74, %s75
    %p84 = scmp.eq.s32.totalorder %s22, 0
    %p85 = por %p83, %p84
    %p86 = scmp.ne.s32.totalorder %s74, %s75
    %p87 = scmp.eq.s32.totalorder %s23, 1
    %p88 = por %p86, %p87
    %p90 = scmp.ne.s32.totalorder %s75, %s89
    %p91 = scmp.eq.s32.totalorder %s23, 0
    %p92 = por %p90, %p91
    %s94 = sadd.s32 %s93, 1
    %p97 = scmp.eq.s32.totalorder %s17, 1
    %p98 = scmp.ne.s32.totalorder %s93, %s95
    %p99 = scmp.eq.s32.totalorder %s17, 0
    %p100 = por %p98, %p99
    %p101 = scmp.ne.s32.totalorder %s93, %s95
    %p102 = scmp.eq.s32.totalorder %s22, 1
    %p103 = por %p101, %p102
    %p104 = scmp.ne.s32.totalorder %s95, %s96
    %p105 = scmp.eq.s32.totalorder %s22, 0
    %p106 = por %p104, %p105
    %p107 = scmp.ne.s32.totalorder %s95, %s96
    %p108 = scmp.eq.s32.totalorder %s23, 1
    %p109 = por %p107, %p108
    %p111 = scmp.ne.s32.totalorder %s96, %s110
    %p112 = scmp.eq.s32.totalorder %s23, 0
    %p113 = por %p111, %p112
    %s115 = sadd.s32 %s114, 1
    %p118 = scmp.eq.s32.totalorder %s17, 1
    %p119 = scmp.ne.s32.totalorder %s114, %s116
    %p120 = scmp.eq.s32.totalorder %s17, 0
    %p121 = por %p119, %p120
    %p122 = scmp.ne.s32.totalorder %s114, %s116
    %p123 = scmp.eq.s32.totalorder %s22, 1
    %p124 = por %p122, %p123
    %p125 = scmp.ne.s32.totalorder %s116, %s117
    %p126 = scmp.eq.s32.totalorder %s22, 0
    %p127 = por %p125, %p126
    %p128 = scmp.ne.s32.totalorder %s116, %s117
    %p129 = scmp.eq.s32.totalorder %s23, 1
    %p130 = por %p128, %p129
    %p132 = scmp.ne.s32.totalorder %s117, %s131
    %p133 = scmp.eq.s32.totalorder %s23, 0
    %p134 = por %p132, %p133
    %s136 = sadd.s32 %s135, 1
    %p139 = scmp.eq.s32.totalorder %s17, 1
    %p140 = scmp.ne.s32.totalorder %s135, %s137
    %p141 = scmp.eq.s32.totalorder %s17, 0
    %p142 = por %p140, %p141
    %p143 = scmp.ne.s32.totalorder %s135, %s137
    %p144 = scmp.eq.s32.totalorder %s22, 1
    %p145 = por %p143, %p144
    %p146 = scmp.ne.s32.totalorder %s137, %s138
    %p147 = scmp.eq.s32.totalorder %s22, 0
    %p148 = por %p146, %p147
    %p149 = scmp.ne.s32.totalorder %s137, %s138
    %p150 = scmp.eq.s32.totalorder %s23, 1
    %p151 = por %p149, %p150
    %p153 = scmp.ne.s32.totalorder %s138, %s152
    %p154 = scmp.eq.s32.totalorder %s23, 0
    %p155 = por %p153, %p154
    %s157 = sadd.s32 %s156, 1
    %p160 = scmp.eq.s32.totalorder %s17, 1
    %p161 = scmp.ne.s32.totalorder %s156, %s158
    %p162 = scmp.eq.s32.totalorder %s17, 0
    %p163 = por %p161, %p162
    %p164 = scmp.ne.s32.totalorder %s156, %s158
    %p165 = scmp.eq.s32.totalorder %s22, 1
    %p166 = por %p164, %p165
    %p167 = scmp.ne.s32.totalorder %s158, %s159
    %p168 = scmp.eq.s32.totalorder %s22, 0
    %p169 = por %p167, %p168
    %p170 = scmp.ne.s32.totalorder %s158, %s159
    %p171 = scmp.eq.s32.totalorder %s23, 1
    %p172 = por %p170, %p171
    %p174 = scmp.ne.s32.totalorder %s159, %s173
    %p175 = scmp.eq.s32.totalorder %s23, 0
    %p176 = por %p174, %p175
    %s178 = sadd.s32 %s177, 1
    %p181 = scmp.eq.s32.totalorder %s17, 1
    %p182 = scmp.ne.s32.totalorder %s177, %s179
    %p183 = scmp.eq.s32.totalorder %s17, 0
    %p184 = por %p182, %p183
    %p185 = scmp.ne.s32.totalorder %s177, %s179
    %p186 = scmp.eq.s32.totalorder %s22, 1
    %p187 = por %p185, %p186
    %p188 = scmp.ne.s32.totalorder %s179, %s180
    %p189 = scmp.eq.s32.totalorder %s22, 0
    %p190 = por %p188, %p189
    %p191 = scmp.ne.s32.totalorder %s179, %s180
    %p192 = scmp.eq.s32.totalorder %s23, 1
    %p193 = por %p191, %p192
    %p195 = scmp.ne.s32.totalorder %s180, %s194
    %p196 = scmp.eq.s32.totalorder %s23, 0
    %p197 = por %p195, %p196
    %s199 = sadd.s32 %s198, 1
    %p202 = scmp.eq.s32.totalorder %s17, 1
    %p203 = scmp.ne.s32.totalorder %s198, %s200
    %p204 = scmp.eq.s32.totalorder %s17, 0
    %p205 = por %p203, %p204
    %p206 = scmp.ne.s32.totalorder %s198, %s200
    %p207 = scmp.eq.s32.totalorder %s22, 1
    %p208 = por %p206, %p207
    %p209 = scmp.ne.s32.totalorder %s200, %s201
    %p210 = scmp.eq.s32.totalorder %s22, 0
    %p211 = por %p209, %p210
    %p212 = scmp.ne.s32.totalorder %s200, %s201
    %p213 = scmp.eq.s32.totalorder %s23, 1
    %p214 = por %p212, %p213
    %p216 = scmp.ne.s32.totalorder %s201, %s215
    %p217 = scmp.eq.s32.totalorder %s23, 0
    %p218 = por %p216, %p217
    %s220 = sadd.s32 %s219, 1
    %p223 = scmp.eq.s32.totalorder %s17, 1
    %p224 = scmp.ne.s32.totalorder %s219, %s221
    %p225 = scmp.eq.s32.totalorder %s17, 0
    %p226 = por %p224, %p225
    %p227 = scmp.ne.s32.totalorder %s219, %s221
    %p228 = scmp.eq.s32.totalorder %s22, 1
    %p229 = por %p227, %p228
    %p230 = scmp.ne.s32.totalorder %s221, %s222
    %p231 = scmp.eq.s32.totalorder %s22, 0
    %p232 = por %p230, %p231
    %p233 = scmp.ne.s32.totalorder %s221, %s222
    %p234 = scmp.eq.s32.totalorder %s23, 1
    %p235 = por %p233, %p234
    %p237 = scmp.ne.s32.totalorder %s222, %s236
    %p238 = scmp.eq.s32.totalorder %s23, 0
    %p239 = por %p237, %p238
    %s241 = sadd.s32 %s240, 1
    %p244 = scmp.eq.s32.totalorder %s17, 1
    %p245 = scmp.ne.s32.totalorder %s240, %s242
    %p246 = scmp.eq.s32.totalorder %s17, 0
    %p247 = por %p245, %p246
    %p248 = scmp.ne.s32.totalorder %s240, %s242
    %p249 = scmp.eq.s32.totalorder %s22, 1
    %p250 = por %p248, %p249
    %p251 = scmp.ne.s32.totalorder %s242, %s243
    %p252 = scmp.eq.s32.totalorder %s22, 0
    %p253 = por %p251, %p252
    %p254 = scmp.ne.s32.totalorder %s242, %s243
    %p255 = scmp.eq.s32.totalorder %s23, 1
    %p256 = por %p254, %p255
    %p258 = scmp.ne.s32.totalorder %s243, %s257
    %p259 = scmp.eq.s32.totalorder %s23, 0
    %p260 = por %p258, %p259
    %s261 = ssub.s32 %s17, %s24
    %p262 = scmp.eq.s32.totalorder %s261, 0
    %s264 = sadd.s32 %s263, 1
    %s265 = scalar_select %p262, %s263, %s264
    %p268 = pneg %p262
    %p269 = scmp.eq.s32.totalorder %s17, 1
    %p270 = por %p268, %p269
    %p271 = scmp.ne.s32.totalorder %s263, %s266
    %p272 = scmp.eq.s32.totalorder %s17, 0
    %p273 = por %p271, %p272
    %p274 = scmp.ne.s32.totalorder %s263, %s266
    %p275 = scmp.eq.s32.totalorder %s22, 1
    %p276 = por %p274, %p275
    %p277 = scmp.ne.s32.totalorder %s266, %s267
    %p278 = scmp.eq.s32.totalorder %s22, 0
    %p279 = por %p277, %p278
    %p280 = scmp.ne.s32.totalorder %s266, %s267
    %p281 = scmp.eq.s32.totalorder %s23, 1
    %p282 = por %p280, %p281
    %p284 = scmp.ne.s32.totalorder %s267, %s283
    %p285 = scmp.eq.s32.totalorder %s23, 0
    %p286 = por %p284, %p285
    %p287 = scmp.le.s32.totalorder 1, %s17
    %p288 = scmp.lt.s32.totalorder %s17, 3
    %p289 = pnand %p287, %p288
    %p290 = pneg %p289
    // Predicated region
    $region9: #{tpu_custom_call.1} parent=5 // pred_check
      _
    $region10: #{tpu_custom_call.1} parent=5 // pred_check_branch
      %292 = sbr.rel (%p289) target = $region12
    $region11: #{tpu_custom_call.1} parent=5 // pred_region
      %s293 = ssub.s32 %s17, 1
      // Predicated region
      $region13: #{tpu_custom_call.1} parent=11 // pred_check
        %p294 = pneg %p64
      $region14: #{tpu_custom_call.1} parent=11 // pred_check_branch
        %296 = sbr.rel (%p294) target = $region16
      $region15: #{tpu_custom_call.1} parent=11 // pred_region
        _
      $region16: #{tpu_custom_call.1} parent=11 // pred_fallthru
        _
      // Predicated region
      $region17: #{tpu_custom_call.1} parent=11 // pred_check
        %p297 = pneg %p85
      $region18: #{tpu_custom_call.1} parent=11 // pred_check_branch
        %299 = sbr.rel (%p297) target = $region20
      $region19: #{tpu_custom_call.1} parent=11 // pred_region
        _
      $region20: #{tpu_custom_call.1} parent=11 // pred_fallthru
        _
      // Predicated region
      $region21: #{tpu_custom_call.1} parent=11 // pred_check
        %p300 = pneg %p106
      $region22: #{tpu_custom_call.1} parent=11 // pred_check_branch
        %302 = sbr.rel (%p300) target = $region24
      $region23: #{tpu_custom_call.1} parent=11 // pred_region
        _
      $region24: #{tpu_custom_call.1} parent=11 // pred_fallthru
        _
      // Predicated region
      $region25: #{tpu_custom_call.1} parent=11 // pred_check
        %p303 = pneg %p127
      $region26: #{tpu_custom_call.1} parent=11 // pred_check_branch
        %305 = sbr.rel (%p303) target = $region28
      $region27: #{tpu_custom_call.1} parent=11 // pred_region
        _
      $region28: #{tpu_custom_call.1} parent=11 // pred_fallthru
        _
      // Predicated region
      $region29: #{tpu_custom_call.1} parent=11 // pred_check
        %p306 = pneg %p148
      $region30: #{tpu_custom_call.1} parent=11 // pred_check_branch
        %308 = sbr.rel (%p306) target = $region32
      $region31: #{tpu_custom_call.1} parent=11 // pred_region
        _
      $region32: #{tpu_custom_call.1} parent=11 // pred_fallthru
        _
      // Predicated region
      $region33: #{tpu_custom_call.1} parent=11 // pred_check
        %p309 = pneg %p169
      $region34: #{tpu_custom_call.1} parent=11 // pred_check_branch
        %311 = sbr.rel (%p309) target = $region36
      $region35: #{tpu_custom_call.1} parent=11 // pred_region
        _
      $region36: #{tpu_custom_call.1} parent=11 // pred_fallthru
        _
      // Predicated region
      $region37: #{tpu_custom_call.1} parent=11 // pred_check
        %p312 = pneg %p190
      $region38: #{tpu_custom_call.1} parent=11 // pred_check_branch
        %314 = sbr.rel (%p312) target = $region40
      $region39: #{tpu_custom_call.1} parent=11 // pred_region
        _
      $region40: #{tpu_custom_call.1} parent=11 // pred_fallthru
        _
      // Predicated region
      $region41: #{tpu_custom_call.1} parent=11 // pred_check
        %p315 = pneg %p211
      $region42: #{tpu_custom_call.1} parent=11 // pred_check_branch
        %317 = sbr.rel (%p315) target = $region44
      $region43: #{tpu_custom_call.1} parent=11 // pred_region
        _
      $region44: #{tpu_custom_call.1} parent=11 // pred_fallthru
        _
      // Predicated region
      $region45: #{tpu_custom_call.1} parent=11 // pred_check
        %p318 = pneg %p232
      $region46: #{tpu_custom_call.1} parent=11 // pred_check_branch
        %320 = sbr.rel (%p318) target = $region48
      $region47: #{tpu_custom_call.1} parent=11 // pred_region
        _
      $region48: #{tpu_custom_call.1} parent=11 // pred_fallthru
        _
      // Predicated region
      $region49: #{tpu_custom_call.1} parent=11 // pred_check
        %p321 = pneg %p253
      $region50: #{tpu_custom_call.1} parent=11 // pred_check_branch
        %323 = sbr.rel (%p321) target = $region52
      $region51: #{tpu_custom_call.1} parent=11 // pred_region
        _
      $region52: #{tpu_custom_call.1} parent=11 // pred_fallthru
        _
    $region12: #{tpu_custom_call.1} parent=5 // pred_fallthru
      _
    %p324 = scmp.lt.s32.totalorder %s17, 2
    // Predicated region
    $region53: #{tpu_custom_call.1} parent=5 // pred_check
      %p325 = pneg %p324
    $region54: #{tpu_custom_call.1} parent=5 // pred_check_branch
      %327 = sbr.rel (%p325) target = $region56
    $region55: #{tpu_custom_call.1} parent=5 // pred_region
      // Predicated region
      $region57: #{tpu_custom_call.1} parent=55 // pred_check
        %p328 = pneg %p37
      $region58: #{tpu_custom_call.1} parent=55 // pred_check_branch
        %330 = sbr.rel (%p328) target = $region60
      $region59: #{tpu_custom_call.1} parent=55 // pred_region
        %s331 = smul.u32 16, %s17
        %p332 = scmp.lt.s32.totalorder %s331, 31
        %s333 = scalar_select %p332, %s331, 31
        %s334 = smul.addr %s333, 4
        %s335 = scalar_lea.vmem %s0, %s334
        %s336 = smul.u32 16, %s17
      $region60: #{tpu_custom_call.1} parent=55 // pred_fallthru
        _
    $region56: #{tpu_custom_call.1} parent=5 // pred_fallthru
      _
    %p337 = scmp.le.s32.totalorder 1, %s17
    %p338 = scmp.lt.s32.totalorder %s17, 3
    %p339 = pnand %p337, %p338
    %p340 = pneg %p339
    // Predicated region
    $region61: #{tpu_custom_call.1} parent=5 // pred_check
      _
    $region62: #{tpu_custom_call.1} parent=5 // pred_check_branch
      %342 = sbr.rel (%p339) target = $region64
    $region63: #{tpu_custom_call.1} parent=5 // pred_region
      %s343 = ssub.s32 %s17, 1
      %s344 = smul.u32 16, %s22
      %p345 = scmp.lt.s32.totalorder %s344, 31
      %s346 = scalar_select %p345, %s344, 31
      %s347 = smul.addr %s346, 4
      %s348 = scalar_lea.vmem %s0, %s347
      %p349 = pneg %p43
      %p350 = pneg %p40
      %p351 = pneg %p64
      %p352 = pneg %p61
      %p353 = pneg %p85
      %p354 = pneg %p82
      %p355 = pneg %p106
      %p356 = pneg %p103
      %p357 = pneg %p127
      %p358 = pneg %p124
      %p359 = pneg %p148
      %p360 = pneg %p145
      %p361 = pneg %p169
      %p362 = pneg %p166
      %p363 = pneg %p190
      %p364 = pneg %p187
      %p365 = pneg %p211
      %p366 = pneg %p208
      %p367 = pneg %p232
      %p368 = pneg %p229
      %p369 = pneg %p253
      %p370 = pneg %p250
      %p371 = pneg %p279
      %p372 = pneg %p276
      %s373 = smul.u32 16, %s22
      %p374 = scmp.lt.s32.totalorder %s373, 31
      %s375 = scalar_select %p374, %s373, 31
      %s376 = smul.addr %s375, 4
      %s377 = scalar_lea.vmem %s11, %s376
      %s378 = smul.u32 16, %s22
      %p379 = scmp.lt.s32.totalorder %s378, 31
      %s380 = scalar_select %p379, %s378, 31
      %s381 = smul.addr %s380, 4
      %s382 = scalar_lea.vmem %s0, %s381
      %s383 = smul.u32 16, %s22
      %s384 = smul.u32 16, %s22
      %p385 = scmp.lt.s32.totalorder %s384, 31
      %s386 = scalar_select %p385, %s384, 31
      %s387 = smul.addr %s386, 4
      %s388 = scalar_lea.vmem %s11, %s387
      %s389 = smul.u32 16, %s22
      %v391 = vld [vmem:[%s382] sm:$0xf]
      %v392 = vld [vmem:[%s382 + $0x4] sm:$0xf]
      %v393 = vld [vmem:[%s382 + $0x8] sm:$0xf]
      %v394 = vld [vmem:[%s382 + $0xc] sm:$0xf]
      %v395 = vld [vmem:[%s382 + $0x10] sm:$0xf]
      %v396 = vld [vmem:[%s382 + $0x14] sm:$0xf]
      %v397 = vld [vmem:[%s382 + $0x18] sm:$0xf]
      %v398 = vld [vmem:[%s382 + $0x1c] sm:$0xf]
      %v399 = vld [vmem:[%s382 + $0x20] sm:$0xf]
      %v400 = vld [vmem:[%s382 + $0x24] sm:$0xf]
      %v401 = vld [vmem:[%s382 + $0x28] sm:$0xf]
      %v402 = vld [vmem:[%s382 + $0x2c] sm:$0xf]
      %v403 = vld [vmem:[%s382 + $0x30] sm:$0xf]
      %v404 = vld [vmem:[%s382 + $0x34] sm:$0xf]
      %v405 = vld [vmem:[%s382 + $0x38] sm:$0xf]
      %v406 = vld [vmem:[%s382 + $0x3c] sm:$0xf]
      %v407 = vld [vmem:[%s1] sm:$0xf]
      %v408 = vld [vmem:[%s1 + $0x4] sm:$0xf]
      %v409 = vld [vmem:[%s1 + $0x8] sm:$0xf]
      %v410 = vld [vmem:[%s1 + $0xc] sm:$0xf]
      %v411 = vld [vmem:[%s2] sm:$0x1]
      %v413 = vlaneseq
      %v414 = vshrl.u32 %v413, 7
      %v415 = vsub.s32 0, %v414
      %v416 = vrot.slane %v411, %v415
      %v434 = vunpack.c.l.b16 %v391
      %v435 = vunpack.c.l.b16 %v392
      %v436 = vunpack.c.l.b16 %v393
      %v437 = vunpack.c.l.b16 %v394
      %v438 = vunpack.c.l.b16 %v395
      %v439 = vunpack.c.l.b16 %v396
      %v440 = vunpack.c.l.b16 %v397
      %v441 = vunpack.c.l.b16 %v398
      %v442 = vunpack.c.l.b16 %v399
      %v443 = vunpack.c.l.b16 %v400
      %v444 = vunpack.c.l.b16 %v401
      %v445 = vunpack.c.l.b16 %v402
      %v446 = vunpack.c.l.b16 %v403
      %v447 = vunpack.c.l.b16 %v404
      %v448 = vunpack.c.l.b16 %v405
      %v449 = vunpack.c.l.b16 %v406
      %v450 = vpack.c.b16 %v435, %v434
      %v451 = vpack.c.b16 %v437, %v436
      %v452 = vpack.c.b16 %v439, %v438
      %v453 = vpack.c.b16 %v441, %v440
      %v454 = vpack.c.b16 %v443, %v442
      %v455 = vpack.c.b16 %v445, %v444
      %v456 = vpack.c.b16 %v447, %v446
      %v457 = vpack.c.b16 %v449, %v448
      %v462 = vunpack.c.l.b16 %v407
      %v463 = vunpack.c.l.b16 %v408
      %v464 = vunpack.c.l.b16 %v409
      %v465 = vunpack.c.l.b16 %v410
      %v466 = vpack.c.b16 %v463, %v462
      %v467 = vpack.c.b16 %v465, %v464
      %vm470 = vcmask 261120
      %v472 = vsel %vm470, %v450, 0
      %v475 = vsel %vm470, %v451, 0
      %v478 = vsel %vm470, %v452, 0
      %v481 = vsel %vm470, %v453, 0
      %v484 = vsel %vm470, %v454, 0
      %v487 = vsel %vm470, %v455, 0
      %v490 = vsel %vm470, %v456, 0
      %v493 = vsel %vm470, %v457, 0
      %495 = vmatprep.subr.bf16.mxu0 0
      %496 = vmatpush1.bf16.msra.mxu0 %v466
      %497 = vmatprep.subr.bf16.mxu0 0
      %498 = vmatpush1.bf16.msra.mxu0 %v467
      %499 = vmatprep.subr.bf16.mxu0 0
      %500 = vmatpush1.bf16.msra.mxu0 0
      %501 = vmatprep.subr.bf16.mxu0 0
      %502 = vmatpush1.bf16.msra.mxu0 0
      %503 = vmatprep.subr.bf16.mxu0 0
      %504 = vmatpush1.bf16.msra.mxu0 0
      %505 = vmatprep.subr.bf16.mxu0 0
      %506 = vmatpush1.bf16.msra.mxu0 0
      %507 = vmatprep.subr.bf16.mxu0 0
      %508 = vmatpush1.bf16.msra.mxu0 0
      %509 = vmatprep.subr.bf16.mxu0 0
      %510 = vmatpush1.bf16.msra.mxu0 0
      %511 = vmatprep.subr.bf16.mxu0 0
      %512 = vmatpush1.bf16.msra.mxu0 0
      %513 = vmatprep.subr.bf16.mxu0 0
      %514 = vmatpush1.bf16.msra.mxu0 0
      %515 = vmatprep.subr.bf16.mxu0 0
      %516 = vmatpush1.bf16.msra.mxu0 0
      %517 = vmatprep.subr.bf16.mxu0 0
      %518 = vmatpush1.bf16.msra.mxu0 0
      %519 = vmatprep.subr.bf16.mxu0 0
      %520 = vmatpush1.bf16.msra.mxu0 0
      %521 = vmatprep.subr.bf16.mxu0 0
      %522 = vmatpush1.bf16.msra.mxu0 0
      %523 = vmatprep.subr.bf16.mxu0 0
      %524 = vmatpush1.bf16.msra.mxu0 0
      %525 = vmatprep.subr.bf16.mxu0 0
      %526 = vmatpush1.bf16.msra.mxu0 0
      %527 = vmatprep.mubr.bf16.mxu0 0
      %528 = vmatmul.mubr.bf16.gmra.mrb[0].mxu0 %v472
      %v529 = vpop.f32.mrb[0].mxu0
      %v530 = vadd.f32 %v416, %v529
      %v531 = vpop.f32.mrb[0].mxu0
      %v532 = vpop.f32.mrb[0].mxu0
      %v533 = vadd.f32 %v416, %v532
      %v534 = vpop.f32.mrb[0].mxu0
      %535 = vmatprep.mubr.bf16.mxu0 0
      %536 = vmatmul.mubr.bf16.gmra.mrb[0].mxu0 %v475
      %v537 = vpop.f32.mrb[0].mxu0
      %v538 = vadd.f32 %v416, %v537
      %v539 = vpop.f32.mrb[0].mxu0
      %v540 = vpop.f32.mrb[0].mxu0
      %v541 = vadd.f32 %v416, %v540
      %v542 = vpop.f32.mrb[0].mxu0
      %543 = vmatprep.mubr.bf16.mxu0 0
      %544 = vmatmul.mubr.bf16.gmra.mrb[0].mxu0 %v478
      %v545 = vpop.f32.mrb[0].mxu0
      %v546 = vadd.f32 %v416, %v545
      %v547 = vpop.f32.mrb[0].mxu0
      %v548 = vpop.f32.mrb[0].mxu0
      %v549 = vadd.f32 %v416, %v548
      %v550 = vpop.f32.mrb[0].mxu0
      %551 = vmatprep.mubr.bf16.mxu0 0
      %552 = vmatmul.mubr.bf16.gmra.mrb[0].mxu0 %v481
      %v553 = vpop.f32.mrb[0].mxu0
      %v554 = vadd.f32 %v416, %v553
      %v555 = vpop.f32.mrb[0].mxu0
      %v556 = vpop.f32.mrb[0].mxu0
      %v557 = vadd.f32 %v416, %v556
      %v558 = vpop.f32.mrb[0].mxu0
      %559 = vmatprep.mubr.bf16.mxu0 0
      %560 = vmatmul.mubr.bf16.gmra.mrb[0].mxu0 %v484
      %v561 = vpop.f32.mrb[0].mxu0
      %v562 = vadd.f32 %v416, %v561
      %v563 = vpop.f32.mrb[0].mxu0
      %v564 = vpop.f32.mrb[0].mxu0
      %v565 = vadd.f32 %v416, %v564
      %v566 = vpop.f32.mrb[0].mxu0
      %567 = vmatprep.mubr.bf16.mxu0 0
      %568 = vmatmul.mubr.bf16.gmra.mrb[0].mxu0 %v487
      %v569 = vpop.f32.mrb[0].mxu0
      %v570 = vadd.f32 %v416, %v569
      %v571 = vpop.f32.mrb[0].mxu0
      %v572 = vpop.f32.mrb[0].mxu0
      %v573 = vadd.f32 %v416, %v572
      %v574 = vpop.f32.mrb[0].mxu0
      %575 = vmatprep.mubr.bf16.mxu0 0
      %576 = vmatmul.mubr.bf16.gmra.mrb[0].mxu0 %v490
      %v577 = vpop.f32.mrb[0].mxu0
      %v578 = vadd.f32 %v416, %v577
      %v579 = vpop.f32.mrb[0].mxu0
      %v580 = vpop.f32.mrb[0].mxu0
      %v581 = vadd.f32 %v416, %v580
      %v582 = vpop.f32.mrb[0].mxu0
      %583 = vmatprep.mubr.bf16.mxu0 0
      %584 = vmatmul.mubr.bf16.gmra.mrb[0].mxu0 %v493
      %v585 = vpop.f32.mrb[0].mxu0
      %v586 = vadd.f32 %v416, %v585
      %v587 = vpop.f32.mrb[0].mxu0
      %v588 = vpop.f32.mrb[0].mxu0
      %v589 = vadd.f32 %v416, %v588
      %v590 = vpop.f32.mrb[0].mxu0
      %591 = vdwg.mxu0
      %v592 = vmax.f32 %v530, 0.0
      %v593 = vmax.f32 %v533, 0.0
      %v594 = vmax.f32 %v538, 0.0
      %v595 = vmax.f32 %v541, 0.0
      %v596 = vmax.f32 %v546, 0.0
      %v597 = vmax.f32 %v549, 0.0
      %v598 = vmax.f32 %v554, 0.0
      %v599 = vmax.f32 %v557, 0.0
      %v600 = vmax.f32 %v562, 0.0
      %v601 = vmax.f32 %v565, 0.0
      %v602 = vmax.f32 %v570, 0.0
      %v603 = vmax.f32 %v573, 0.0
      %v604 = vmax.f32 %v578, 0.0
      %v605 = vmax.f32 %v581, 0.0
      %v606 = vmax.f32 %v586, 0.0
      %v607 = vmax.f32 %v589, 0.0
      %v608 = vpack.c.bf16 %v593, %v592
      %v609 = vpack.c.bf16 %v595, %v594
      %v610 = vpack.c.bf16 %v597, %v596
      %v611 = vpack.c.bf16 %v599, %v598
      %v612 = vpack.c.bf16 %v601, %v600
      %v613 = vpack.c.bf16 %v603, %v602
      %v614 = vpack.c.bf16 %v605, %v604
      %v615 = vpack.c.bf16 %v607, %v606
      %v616 = vld [vmem:[%s3] sm:$0xff]
      %v617 = vld [vmem:[%s3 + $0x8] sm:$0xff]
      %v618 = vld [vmem:[%s3 + $0x10] sm:$0xff]
      %v619 = vld [vmem:[%s3 + $0x18] sm:$0xff]
      %v620 = vld [vmem:[%s3 + $0x20] sm:$0xff]
      %v621 = vld [vmem:[%s3 + $0x28] sm:$0xff]
      %v622 = vld [vmem:[%s3 + $0x30] sm:$0xff]
      %v623 = vld [vmem:[%s3 + $0x38] sm:$0xff]
      %v624 = vld [vmem:[%s3 + $0x40] sm:$0xff]
      %v625 = vld [vmem:[%s3 + $0x48] sm:$0xff]
      %v626 = vld [vmem:[%s3 + $0x50] sm:$0xff]
      %v627 = vld [vmem:[%s3 + $0x58] sm:$0xff]
      %v628 = vld [vmem:[%s3 + $0x60] sm:$0xff]
      %v629 = vld [vmem:[%s3 + $0x68] sm:$0xff]
      %v630 = vld [vmem:[%s3 + $0x70] sm:$0xff]
      %v631 = vld [vmem:[%s3 + $0x78] sm:$0xff]
      %v632 = vld [vmem:[%s4] sm:$0x3]
      %v634 = vlaneseq
      %v635 = vshrl.u32 %v634, 7
      %v636 = vsub.s32 0, %v635
      %v637 = vrot.slane %v632, %v636
      %v638 = vlaneseq
      %v639 = vshrl.u32 %v638, 7
      %v640 = vsub.s32 1, %v639
      %v641 = vrot.slane %v632, %v640
      %v660 = vunpack.c.l.b16 %v616
      %v661 = vunpack.c.h.b16 %v616
      %v662 = vunpack.c.l.b16 %v617
      %v663 = vunpack.c.h.b16 %v617
      %v664 = vunpack.c.l.b16 %v618
      %v665 = vunpack.c.h.b16 %v618
      %v666 = vunpack.c.l.b16 %v619
      %v667 = vunpack.c.h.b16 %v619
      %v668 = vunpack.c.l.b16 %v620
      %v669 = vunpack.c.h.b16 %v620
      %v670 = vunpack.c.l.b16 %v621
      %v671 = vunpack.c.h.b16 %v621
      %v672 = vunpack.c.l.b16 %v622
      %v673 = vunpack.c.h.b16 %v622
      %v674 = vunpack.c.l.b16 %v623
      %v675 = vunpack.c.h.b16 %v623
      %v676 = vunpack.c.l.b16 %v624
      %v677 = vunpack.c.h.b16 %v624
      %v678 = vunpack.c.l.b16 %v625
      %v679 = vunpack.c.h.b16 %v625
      %v680 = vunpack.c.l.b16 %v626
      %v681 = vunpack.c.h.b16 %v626
      %v682 = vunpack.c.l.b16 %v627
      %v683 = vunpack.c.h.b16 %v627
      %v684 = vunpack.c.l.b16 %v628
      %v685 = vunpack.c.h.b16 %v628
      %v686 = vunpack.c.l.b16 %v629
      %v687 = vunpack.c.h.b16 %v629
      %v688 = vunpack.c.l.b16 %v630
      %v689 = vunpack.c.h.b16 %v630
      %v690 = vunpack.c.l.b16 %v631
      %v691 = vunpack.c.h.b16 %v631
      %v692 = vpack.c.b16 %v662, %v660
      %v693 = vpack.c.b16 %v663, %v661
      %v694 = vpack.c.b16 %v666, %v664
      %v695 = vpack.c.b16 %v667, %v665
      %v696 = vpack.c.b16 %v670, %v668
      %v697 = vpack.c.b16 %v671, %v669
      %v698 = vpack.c.b16 %v674, %v672
      %v699 = vpack.c.b16 %v675, %v673
      %v700 = vpack.c.b16 %v678, %v676
      %v701 = vpack.c.b16 %v679, %v677
      %v702 = vpack.c.b16 %v682, %v680
      %v703 = vpack.c.b16 %v683, %v681
      %v704 = vpack.c.b16 %v686, %v684
      %v705 = vpack.c.b16 %v687, %v685
      %v706 = vpack.c.b16 %v690, %v688
      %v707 = vpack.c.b16 %v691, %v689
      %724 = vmatprep.subr.bf16.mxu0 %v693
      %725 = vmatpush1.bf16.msra.mxu0 %v692
      %726 = vmatprep.subr.bf16.mxu0 %v695
      %727 = vmatpush1.bf16.msra.mxu0 %v694
      %728 = vmatprep.subr.bf16.mxu0 %v697
      %729 = vmatpush1.bf16.msra.mxu0 %v696
      %730 = vmatprep.subr.bf16.mxu0 %v699
      %731 = vmatpush1.bf16.msra.mxu0 %v698
      %732 = vmatprep.subr.bf16.mxu0 %v701
      %733 = vmatpush1.bf16.msra.mxu0 %v700
      %734 = vmatprep.subr.bf16.mxu0 %v703
      %735 = vmatpush1.bf16.msra.mxu0 %v702
      %736 = vmatprep.subr.bf16.mxu0 %v705
      %737 = vmatpush1.bf16.msra.mxu0 %v704
      %738 = vmatprep.subr.bf16.mxu0 %v707
      %739 = vmatpush1.bf16.msra.mxu0 %v706
      %740 = vmatprep.subr.bf16.mxu0 0
      %741 = vmatpush1.bf16.msra.mxu0 0
      %742 = vmatprep.subr.bf16.mxu0 0
      %743 = vmatpush1.bf16.msra.mxu0 0
      %744 = vmatprep.subr.bf16.mxu0 0
      %745 = vmatpush1.bf16.msra.mxu0 0
      %746 = vmatprep.subr.bf16.mxu0 0
      %747 = vmatpush1.bf16.msra.mxu0 0
      %748 = vmatprep.subr.bf16.mxu0 0
      %749 = vmatpush1.bf16.msra.mxu0 0
      %750 = vmatprep.subr.bf16.mxu0 0
      %751 = vmatpush1.bf16.msra.mxu0 0
      %752 = vmatprep.subr.bf16.mxu0 0
      %753 = vmatpush1.bf16.msra.mxu0 0
      %754 = vmatprep.subr.bf16.mxu0 0
      %755 = vmatpush1.bf16.msra.mxu0 0
      %756 = vmatprep.mubr.bf16.mxu0 0
      %757 = vmatmul.mubr.bf16.gmra.mrb[0].mxu0 %v608
      %v758 = vpop.f32.mrb[0].mxu0
      %v759 = vadd.f32 %v637, %v758
      %v760 = vpop.f32.mrb[0].mxu0
      %v761 = vadd.f32 %v641, %v760
      %v762 = vpop.f32.mrb[0].mxu0
      %v763 = vadd.f32 %v637, %v762
      %v764 = vpop.f32.mrb[0].mxu0
      %v765 = vadd.f32 %v641, %v764
      %766 = vmatprep.mubr.bf16.mxu0 0
      %767 = vmatmul.mubr.bf16.gmra.mrb[0].mxu0 %v609
      %v768 = vpop.f32.mrb[0].mxu0
      %v769 = vadd.f32 %v637, %v768
      %v770 = vpop.f32.mrb[0].mxu0
      %v771 = vadd.f32 %v641, %v770
      %v772 = vpop.f32.mrb[0].mxu0
      %v773 = vadd.f32 %v637, %v772
      %v774 = vpop.f32.mrb[0].mxu0
      %v775 = vadd.f32 %v641, %v774
      %776 = vmatprep.mubr.bf16.mxu0 0
      %777 = vmatmul.mubr.bf16.gmra.mrb[0].mxu0 %v610
      %v778 = vpop.f32.mrb[0].mxu0
      %v779 = vadd.f32 %v637, %v778
      %v780 = vpop.f32.mrb[0].mxu0
      %v781 = vadd.f32 %v641, %v780
      %v782 = vpop.f32.mrb[0].mxu0
      %v783 = vadd.f32 %v637, %v782
      %v784 = vpop.f32.mrb[0].mxu0
      %v785 = vadd.f32 %v641, %v784
      %786 = vmatprep.mubr.bf16.mxu0 0
      %787 = vmatmul.mubr.bf16.gmra.mrb[0].mxu0 %v611
      %v788 = vpop.f32.mrb[0].mxu0
      %v789 = vadd.f32 %v637, %v788
      %v790 = vpop.f32.mrb[0].mxu0
      %v791 = vadd.f32 %v641, %v790
      %v792 = vpop.f32.mrb[0].mxu0
      %v793 = vadd.f32 %v637, %v792
      %v794 = vpop.f32.mrb[0].mxu0
      %v795 = vadd.f32 %v641, %v794
      %796 = vmatprep.mubr.bf16.mxu0 0
      %797 = vmatmul.mubr.bf16.gmra.mrb[0].mxu0 %v612
      %v798 = vpop.f32.mrb[0].mxu0
      %v799 = vadd.f32 %v637, %v798
      %v800 = vpop.f32.mrb[0].mxu0
      %v801 = vadd.f32 %v641, %v800
      %v802 = vpop.f32.mrb[0].mxu0
      %v803 = vadd.f32 %v637, %v802
      %v804 = vpop.f32.mrb[0].mxu0
      %v805 = vadd.f32 %v641, %v804
      %806 = vmatprep.mubr.bf16.mxu0 0
      %807 = vmatmul.mubr.bf16.gmra.mrb[0].mxu0 %v613
      %v808 = vpop.f32.mrb[0].mxu0
      %v809 = vadd.f32 %v637, %v808
      %v810 = vpop.f32.mrb[0].mxu0
      %v811 = vadd.f32 %v641, %v810
      %v812 = vpop.f32.mrb[0].mxu0
      %v813 = vadd.f32 %v637, %v812
      %v814 = vpop.f32.mrb[0].mxu0
      %v815 = vadd.f32 %v641, %v814
      %816 = vmatprep.mubr.bf16.mxu0 0
      %817 = vmatmul.mubr.bf16.gmra.mrb[0].mxu0 %v614
      %v818 = vpop.f32.mrb[0].mxu0
      %v819 = vadd.f32 %v637, %v818
      %v820 = vpop.f32.mrb[0].mxu0
      %v821 = vadd.f32 %v641, %v820
      %v822 = vpop.f32.mrb[0].mxu0
      %v823 = vadd.f32 %v637, %v822
      %v824 = vpop.f32.mrb[0].mxu0
      %v825 = vadd.f32 %v641, %v824
      %826 = vmatprep.mubr.bf16.mxu0 0
      %827 = vmatmul.mubr.bf16.gmra.mrb[0].mxu0 %v615
      %v828 = vpop.f32.mrb[0].mxu0
      %v829 = vadd.f32 %v637, %v828
      %v830 = vpop.f32.mrb[0].mxu0
      %v831 = vadd.f32 %v641, %v830
      %v832 = vpop.f32.mrb[0].mxu0
      %v833 = vadd.f32 %v637, %v832
      %v834 = vpop.f32.mrb[0].mxu0
      %v835 = vadd.f32 %v641, %v834
      %836 = vdwg.mxu0
      %v837 = vmax.f32 %v759, 0.0
      %v838 = vmax.f32 %v761, 0.0
      %v839 = vmax.f32 %v763, 0.0
      %v840 = vmax.f32 %v765, 0.0
      %v841 = vmax.f32 %v769, 0.0
      %v842 = vmax.f32 %v771, 0.0
      %v843 = vmax.f32 %v773, 0.0
      %v844 = vmax.f32 %v775, 0.0
      %v845 = vmax.f32 %v779, 0.0
      %v846 = vmax.f32 %v781, 0.0
      %v847 = vmax.f32 %v783, 0.0
      %v848 = vmax.f32 %v785, 0.0
      %v849 = vmax.f32 %v789, 0.0
      %v850 = vmax.f32 %v791, 0.0
      %v851 = vmax.f32 %v793, 0.0
      %v852 = vmax.f32 %v795, 0.0
      %v853 = vmax.f32 %v799, 0.0
      %v854 = vmax.f32 %v801, 0.0
      %v855 = vmax.f32 %v803, 0.0
      %v856 = vmax.f32 %v805, 0.0
      %v857 = vmax.f32 %v809, 0.0
      %v858 = vmax.f32 %v811, 0.0
      %v859 = vmax.f32 %v813, 0.0
      %v860 = vmax.f32 %v815, 0.0
      %v861 = vmax.f32 %v819, 0.0
      %v862 = vmax.f32 %v821, 0.0
      %v863 = vmax.f32 %v823, 0.0
      %v864 = vmax.f32 %v825, 0.0
      %v865 = vmax.f32 %v829, 0.0
      %v866 = vmax.f32 %v831, 0.0
      %v867 = vmax.f32 %v833, 0.0
      %v868 = vmax.f32 %v835, 0.0
      %v869 = vpack.c.bf16 %v839, %v837
      %v870 = vpack.c.bf16 %v840, %v838
      %v871 = vpack.c.bf16 %v843, %v841
      %v872 = vpack.c.bf16 %v844, %v842
      %v873 = vpack.c.bf16 %v847, %v845
      %v874 = vpack.c.bf16 %v848, %v846
      %v875 = vpack.c.bf16 %v851, %v849
      %v876 = vpack.c.bf16 %v852, %v850
      %v877 = vpack.c.bf16 %v855, %v853
      %v878 = vpack.c.bf16 %v856, %v854
      %v879 = vpack.c.bf16 %v859, %v857
      %v880 = vpack.c.bf16 %v860, %v858
      %v881 = vpack.c.bf16 %v863, %v861
      %v882 = vpack.c.bf16 %v864, %v862
      %v883 = vpack.c.bf16 %v867, %v865
      %v884 = vpack.c.bf16 %v868, %v866
      %v885 = vld [vmem:[%s5] sm:$0xf]
      %v886 = vld [vmem:[%s5 + $0x4] sm:$0xf]
      %v887 = vld [vmem:[%s5 + $0x8] sm:$0xf]
      %v888 = vld [vmem:[%s5 + $0xc] sm:$0xf]
      %v889 = vld [vmem:[%s5 + $0x10] sm:$0xf]
      %v890 = vld [vmem:[%s5 + $0x14] sm:$0xf]
      %v891 = vld [vmem:[%s5 + $0x18] sm:$0xf]
      %v892 = vld [vmem:[%s5 + $0x1c] sm:$0xf]
      %v893 = vld [vmem:[%s5 + $0x20] sm:$0xf]
      %v894 = vld [vmem:[%s5 + $0x24] sm:$0xf]
      %v895 = vld [vmem:[%s5 + $0x28] sm:$0xf]
      %v896 = vld [vmem:[%s5 + $0x2c] sm:$0xf]
      %v897 = vld [vmem:[%s5 + $0x30] sm:$0xf]
      %v898 = vld [vmem:[%s5 + $0x34] sm:$0xf]
      %v899 = vld [vmem:[%s5 + $0x38] sm:$0xf]
      %v900 = vld [vmem:[%s5 + $0x3c] sm:$0xf]
      %v901 = vld [vmem:[%s5 + $0x40] sm:$0xf]
      %v902 = vld [vmem:[%s5 + $0x44] sm:$0xf]
      %v903 = vld [vmem:[%s5 + $0x48] sm:$0xf]
      %v904 = vld [vmem:[%s5 + $0x4c] sm:$0xf]
      %v905 = vld [vmem:[%s5 + $0x50] sm:$0xf]
      %v906 = vld [vmem:[%s5 + $0x54] sm:$0xf]
      %v907 = vld [vmem:[%s5 + $0x58] sm:$0xf]
      %v908 = vld [vmem:[%s5 + $0x5c] sm:$0xf]
      %v909 = vld [vmem:[%s5 + $0x60] sm:$0xf]
      %v910 = vld [vmem:[%s5 + $0x64] sm:$0xf]
      %v911 = vld [vmem:[%s5 + $0x68] sm:$0xf]
      %v912 = vld [vmem:[%s5 + $0x6c] sm:$0xf]
      %v913 = vld [vmem:[%s5 + $0x70] sm:$0xf]
      %v914 = vld [vmem:[%s5 + $0x74] sm:$0xf]
      %v915 = vld [vmem:[%s5 + $0x78] sm:$0xf]
      %v916 = vld [vmem:[%s5 + $0x7c] sm:$0xf]
      %v917 = vld [vmem:[%s6] sm:$0x1]
      %v919 = vlaneseq
      %v920 = vshrl.u32 %v919, 7
      %v921 = vsub.s32 0, %v920
      %v922 = vrot.slane %v917, %v921
      %v956 = vunpack.c.l.b16 %v885
      %v957 = vunpack.c.l.b16 %v886
      %v958 = vunpack.c.l.b16 %v887
      %v959 = vunpack.c.l.b16 %v888
      %v960 = vunpack.c.l.b16 %v889
      %v961 = vunpack.c.l.b16 %v890
      %v962 = vunpack.c.l.b16 %v891
      %v963 = vunpack.c.l.b16 %v892
      %v964 = vunpack.c.l.b16 %v893
      %v965 = vunpack.c.l.b16 %v894
      %v966 = vunpack.c.l.b16 %v895
      %v967 = vunpack.c.l.b16 %v896
      %v968 = vunpack.c.l.b16 %v897
      %v969 = vunpack.c.l.b16 %v898
      %v970 = vunpack.c.l.b16 %v899
      %v971 = vunpack.c.l.b16 %v900
      %v972 = vunpack.c.l.b16 %v901
      %v973 = vunpack.c.l.b16 %v902
      %v974 = vunpack.c.l.b16 %v903
      %v975 = vunpack.c.l.b16 %v904
      %v976 = vunpack.c.l.b16 %v905
      %v977 = vunpack.c.l.b16 %v906
      %v978 = vunpack.c.l.b16 %v907
      %v979 = vunpack.c.l.b16 %v908
      %v980 = vunpack.c.l.b16 %v909
      %v981 = vunpack.c.l.b16 %v910
      %v982 = vunpack.c.l.b16 %v911
      %v983 = vunpack.c.l.b16 %v912
      %v984 = vunpack.c.l.b16 %v913
      %v985 = vunpack.c.l.b16 %v914
      %v986 = vunpack.c.l.b16 %v915
      %v987 = vunpack.c.l.b16 %v916
      %v988 = vpack.c.b16 %v957, %v956
      %v989 = vpack.c.b16 %v959, %v958
      %v990 = vpack.c.b16 %v961, %v960
      %v991 = vpack.c.b16 %v963, %v962
      %v992 = vpack.c.b16 %v965, %v964
      %v993 = vpack.c.b16 %v967, %v966
      %v994 = vpack.c.b16 %v969, %v968
      %v995 = vpack.c.b16 %v971, %v970
      %v996 = vpack.c.b16 %v973, %v972
      %v997 = vpack.c.b16 %v975, %v974
      %v998 = vpack.c.b16 %v977, %v976
      %v999 = vpack.c.b16 %v979, %v978
      %v1000 = vpack.c.b16 %v981, %v980
      %v1001 = vpack.c.b16 %v983, %v982
      %v1002 = vpack.c.b16 %v985, %v984
      %v1003 = vpack.c.b16 %v987, %v986
      %1020 = vmatprep.subr.bf16.mxu0 0
      %1021 = vmatpush1.bf16.msra.mxu0 %v988
      %1022 = vmatprep.subr.bf16.mxu0 0
      %1023 = vmatpush1.bf16.msra.mxu0 %v989
      %1024 = vmatprep.subr.bf16.mxu0 0
      %1025 = vmatpush1.bf16.msra.mxu0 %v990
      %1026 = vmatprep.subr.bf16.mxu0 0
      %1027 = vmatpush1.bf16.msra.mxu0 %v991
      %1028 = vmatprep.subr.bf16.mxu0 0
      %1029 = vmatpush1.bf16.msra.mxu0 %v992
      %1030 = vmatprep.subr.bf16.mxu0 0
      %1031 = vmatpush1.bf16.msra.mxu0 %v993
      %1032 = vmatprep.subr.bf16.mxu0 0
      %1033 = vmatpush1.bf16.msra.mxu0 %v994
      %1034 = vmatprep.subr.bf16.mxu0 0
      %1035 = vmatpush1.bf16.msra.mxu0 %v995
      %1036 = vmatprep.subr.bf16.mxu0 0
      %1037 = vmatpush1.bf16.msra.mxu0 %v996
      %1038 = vmatprep.subr.bf16.mxu0 0
      %1039 = vmatpush1.bf16.msra.mxu0 %v997
      %1040 = vmatprep.subr.bf16.mxu0 0
      %1041 = vmatpush1.bf16.msra.mxu0 %v998
      %1042 = vmatprep.subr.bf16.mxu0 0
      %1043 = vmatpush1.bf16.msra.mxu0 %v999
      %1044 = vmatprep.subr.bf16.mxu0 0
      %1045 = vmatpush1.bf16.msra.mxu0 %v1000
      %1046 = vmatprep.subr.bf16.mxu0 0
      %1047 = vmatpush1.bf16.msra.mxu0 %v1001
      %1048 = vmatprep.subr.bf16.mxu0 0
      %1049 = vmatpush1.bf16.msra.mxu0 %v1002
      %1050 = vmatprep.subr.bf16.mxu0 0
      %1051 = vmatpush1.bf16.msra.mxu0 %v1003
      %1052 = vmatprep.mubr.bf16.mxu0 %v870
      %1053 = vmatmul.mubr.bf16.gmra.mrb[0].mxu0 %v869
      %v1054 = vpop.f32.mrb[0].mxu0
      %v1055 = vadd.f32 %v922, %v1054
      %v1056 = vpop.f32.mrb[0].mxu0
      %v1057 = vpop.f32.mrb[0].mxu0
      %v1058 = vadd.f32 %v922, %v1057
      %v1059 = vpop.f32.mrb[0].mxu0
      %1060 = vmatprep.mubr.bf16.mxu0 %v872
      %1061 = vmatmul.mubr.bf16.gmra.mrb[0].mxu0 %v871
      %v1062 = vpop.f32.mrb[0].mxu0
      %v1063 = vadd.f32 %v922, %v1062
      %v1064 = vpop.f32.mrb[0].mxu0
      %v1065 = vpop.f32.mrb[0].mxu0
      %v1066 = vadd.f32 %v922, %v1065
      %v1067 = vpop.f32.mrb[0].mxu0
      %1068 = vmatprep.mubr.bf16.mxu0 %v874
      %1069 = vmatmul.mubr.bf16.gmra.mrb[0].mxu0 %v873
      %v1070 = vpop.f32.mrb[0].mxu0
      %v1071 = vadd.f32 %v922, %v1070
      %v1072 = vpop.f32.mrb[0].mxu0
      %v1073 = vpop.f32.mrb[0].mxu0
      %v1074 = vadd.f32 %v922, %v1073
      %v1075 = vpop.f32.mrb[0].mxu0
      %1076 = vmatprep.mubr.bf16.mxu0 %v876
      %1077 = vmatmul.mubr.bf16.gmra.mrb[0].mxu0 %v875
      %v1078 = vpop.f32.mrb[0].mxu0
      %v1079 = vadd.f32 %v922, %v1078
      %v1080 = vpop.f32.mrb[0].mxu0
      %v1081 = vpop.f32.mrb[0].mxu0
      %v1082 = vadd.f32 %v922, %v1081
      %v1083 = vpop.f32.mrb[0].mxu0
      %1084 = vmatprep.mubr.bf16.mxu0 %v878
      %1085 = vmatmul.mubr.bf16.gmra.mrb[0].mxu0 %v877
      %v1086 = vpop.f32.mrb[0].mxu0
      %v1087 = vadd.f32 %v922, %v1086
      %v1088 = vpop.f32.mrb[0].mxu0
      %v1089 = vpop.f32.mrb[0].mxu0
      %v1090 = vadd.f32 %v922, %v1089
      %v1091 = vpop.f32.mrb[0].mxu0
      %1092 = vmatprep.mubr.bf16.mxu0 %v880
      %1093 = vmatmul.mubr.bf16.gmra.mrb[0].mxu0 %v879
      %v1094 = vpop.f32.mrb[0].mxu0
      %v1095 = vadd.f32 %v922, %v1094
      %v1096 = vpop.f32.mrb[0].mxu0
      %v1097 = vpop.f32.mrb[0].mxu0
      %v1098 = vadd.f32 %v922, %v1097
      %v1099 = vpop.f32.mrb[0].mxu0
      %1100 = vmatprep.mubr.bf16.mxu0 %v882
      %1101 = vmatmul.mubr.bf16.gmra.mrb[0].mxu0 %v881
      %v1102 = vpop.f32.mrb[0].mxu0
      %v1103 = vadd.f32 %v922, %v1102
      %v1104 = vpop.f32.mrb[0].mxu0
      %v1105 = vpop.f32.mrb[0].mxu0
      %v1106 = vadd.f32 %v922, %v1105
      %v1107 = vpop.f32.mrb[0].mxu0
      %1108 = vmatprep.mubr.bf16.mxu0 %v884
      %1109 = vmatmul.mubr.bf16.gmra.mrb[0].mxu0 %v883
      %v1110 = vpop.f32.mrb[0].mxu0
      %v1111 = vadd.f32 %v922, %v1110
      %v1112 = vpop.f32.mrb[0].mxu0
      %v1113 = vpop.f32.mrb[0].mxu0
      %v1114 = vadd.f32 %v922, %v1113
      %v1115 = vpop.f32.mrb[0].mxu0
      %1116 = vdwg.mxu0
      %v1117 = vmax.f32 %v1055, 0.0
      %v1118 = vmax.f32 %v1058, 0.0
      %v1119 = vmax.f32 %v1063, 0.0
      %v1120 = vmax.f32 %v1066, 0.0
      %v1121 = vmax.f32 %v1071, 0.0
      %v1122 = vmax.f32 %v1074, 0.0
      %v1123 = vmax.f32 %v1079, 0.0
      %v1124 = vmax.f32 %v1082, 0.0
      %v1125 = vmax.f32 %v1087, 0.0
      %v1126 = vmax.f32 %v1090, 0.0
      %v1127 = vmax.f32 %v1095, 0.0
      %v1128 = vmax.f32 %v1098, 0.0
      %v1129 = vmax.f32 %v1103, 0.0
      %v1130 = vmax.f32 %v1106, 0.0
      %v1131 = vmax.f32 %v1111, 0.0
      %v1132 = vmax.f32 %v1114, 0.0
      %v1133 = vpack.c.bf16 %v1118, %v1117
      %v1134 = vpack.c.bf16 %v1120, %v1119
      %v1135 = vpack.c.bf16 %v1122, %v1121
      %v1136 = vpack.c.bf16 %v1124, %v1123
      %v1137 = vpack.c.bf16 %v1126, %v1125
      %v1138 = vpack.c.bf16 %v1128, %v1127
      %v1139 = vpack.c.bf16 %v1130, %v1129
      %v1140 = vpack.c.bf16 %v1132, %v1131
      %v1141 = vld [vmem:[%s7] sm:$0xf]
      %v1142 = vld [vmem:[%s7 + $0x4] sm:$0xf]
      %v1143 = vld [vmem:[%s7 + $0x8] sm:$0xf]
      %v1144 = vld [vmem:[%s7 + $0xc] sm:$0xf]
      %v1145 = vld [vmem:[%s7 + $0x10] sm:$0xf]
      %v1146 = vld [vmem:[%s7 + $0x14] sm:$0xf]
      %v1147 = vld [vmem:[%s7 + $0x18] sm:$0xf]
      %v1148 = vld [vmem:[%s7 + $0x1c] sm:$0xf]
      %v1149 = vld [vmem:[%s7 + $0x20] sm:$0xf]
      %v1150 = vld [vmem:[%s7 + $0x24] sm:$0xf]
      %v1151 = vld [vmem:[%s7 + $0x28] sm:$0xf]
      %v1152 = vld [vmem:[%s7 + $0x2c] sm:$0xf]
      %v1153 = vld [vmem:[%s7 + $0x30] sm:$0xf]
      %v1154 = vld [vmem:[%s7 + $0x34] sm:$0xf]
      %v1155 = vld [vmem:[%s7 + $0x38] sm:$0xf]
      %v1156 = vld [vmem:[%s7 + $0x3c] sm:$0xf]
      %v1157 = vld [vmem:[%s8] sm:$0x1]
      %v1159 = vlaneseq
      %v1160 = vshrl.u32 %v1159, 7
      %v1161 = vsub.s32 0, %v1160
      %v1162 = vrot.slane %v1157, %v1161
      %v1180 = vunpack.c.l.b16 %v1141
      %v1181 = vunpack.c.l.b16 %v1142
      %v1182 = vunpack.c.l.b16 %v1143
      %v1183 = vunpack.c.l.b16 %v1144
      %v1184 = vunpack.c.l.b16 %v1145
      %v1185 = vunpack.c.l.b16 %v1146
      %v1186 = vunpack.c.l.b16 %v1147
      %v1187 = vunpack.c.l.b16 %v1148
      %v1188 = vunpack.c.l.b16 %v1149
      %v1189 = vunpack.c.l.b16 %v1150
      %v1190 = vunpack.c.l.b16 %v1151
      %v1191 = vunpack.c.l.b16 %v1152
      %v1192 = vunpack.c.l.b16 %v1153
      %v1193 = vunpack.c.l.b16 %v1154
      %v1194 = vunpack.c.l.b16 %v1155
      %v1195 = vunpack.c.l.b16 %v1156
      %v1196 = vpack.c.b16 %v1181, %v1180
      %v1197 = vpack.c.b16 %v1183, %v1182
      %v1198 = vpack.c.b16 %v1185, %v1184
      %v1199 = vpack.c.b16 %v1187, %v1186
      %v1200 = vpack.c.b16 %v1189, %v1188
      %v1201 = vpack.c.b16 %v1191, %v1190
      %v1202 = vpack.c.b16 %v1193, %v1192
      %v1203 = vpack.c.b16 %v1195, %v1194
      %1212 = vmatprep.subr.bf16.mxu0 0
      %1213 = vmatpush1.bf16.msra.mxu0 %v1196
      %1214 = vmatprep.subr.bf16.mxu0 0
      %1215 = vmatpush1.bf16.msra.mxu0 %v1197
      %1216 = vmatprep.subr.bf16.mxu0 0
      %1217 = vmatpush1.bf16.msra.mxu0 %v1198
      %1218 = vmatprep.subr.bf16.mxu0 0
      %1219 = vmatpush1.bf16.msra.mxu0 %v1199
      %1220 = vmatprep.subr.bf16.mxu0 0
      %1221 = vmatpush1.bf16.msra.mxu0 %v1200
      %1222 = vmatprep.subr.bf16.mxu0 0
      %1223 = vmatpush1.bf16.msra.mxu0 %v1201
      %1224 = vmatprep.subr.bf16.mxu0 0
      %1225 = vmatpush1.bf16.msra.mxu0 %v1202
      %1226 = vmatprep.subr.bf16.mxu0 0
      %1227 = vmatpush1.bf16.msra.mxu0 %v1203
      %1228 = vmatprep.subr.bf16.mxu0 0
      %1229 = vmatpush1.bf16.msra.mxu0 0
      %1230 = vmatprep.subr.bf16.mxu0 0
      %1231 = vmatpush1.bf16.msra.mxu0 0
      %1232 = vmatprep.subr.bf16.mxu0 0
      %1233 = vmatpush1.bf16.msra.mxu0 0
      %1234 = vmatprep.subr.bf16.mxu0 0
      %1235 = vmatpush1.bf16.msra.mxu0 0
      %1236 = vmatprep.subr.bf16.mxu0 0
      %1237 = vmatpush1.bf16.msra.mxu0 0
      %1238 = vmatprep.subr.bf16.mxu0 0
      %1239 = vmatpush1.bf16.msra.mxu0 0
      %1240 = vmatprep.subr.bf16.mxu0 0
      %1241 = vmatpush1.bf16.msra.mxu0 0
      %1242 = vmatprep.subr.bf16.mxu0 0
      %1243 = vmatpush1.bf16.msra.mxu0 0
      %1244 = vmatprep.mubr.bf16.mxu0 0
      %1245 = vmatmul.mubr.bf16.gmra.mrb[0].mxu0 %v1133
      %v1246 = vpop.f32.mrb[0].mxu0
      %v1247 = vadd.f32 %v1162, %v1246
      %v1248 = vpop.f32.mrb[0].mxu0
      %v1249 = vpop.f32.mrb[0].mxu0
      %v1250 = vadd.f32 %v1162, %v1249
      %v1251 = vpop.f32.mrb[0].mxu0
      %1252 = vmatprep.mubr.bf16.mxu0 0
      %1253 = vmatmul.mubr.bf16.gmra.mrb[0].mxu0 %v1134
      %v1254 = vpop.f32.mrb[0].mxu0
      %v1255 = vadd.f32 %v1162, %v1254
      %v1256 = vpop.f32.mrb[0].mxu0
      %v1257 = vpop.f32.mrb[0].mxu0
      %v1258 = vadd.f32 %v1162, %v1257
      %v1259 = vpop.f32.mrb[0].mxu0
      %1260 = vmatprep.mubr.bf16.mxu0 0
      %1261 = vmatmul.mubr.bf16.gmra.mrb[0].mxu0 %v1135
      %v1262 = vpop.f32.mrb[0].mxu0
      %v1263 = vadd.f32 %v1162, %v1262
      %v1264 = vpop.f32.mrb[0].mxu0
      %v1265 = vpop.f32.mrb[0].mxu0
      %v1266 = vadd.f32 %v1162, %v1265
      %v1267 = vpop.f32.mrb[0].mxu0
      %1268 = vmatprep.mubr.bf16.mxu0 0
      %1269 = vmatmul.mubr.bf16.gmra.mrb[0].mxu0 %v1136
      %v1270 = vpop.f32.mrb[0].mxu0
      %v1271 = vadd.f32 %v1162, %v1270
      %v1272 = vpop.f32.mrb[0].mxu0
      %v1273 = vpop.f32.mrb[0].mxu0
      %v1274 = vadd.f32 %v1162, %v1273
      %v1275 = vpop.f32.mrb[0].mxu0
      %1276 = vmatprep.mubr.bf16.mxu0 0
      %1277 = vmatmul.mubr.bf16.gmra.mrb[0].mxu0 %v1137
      %v1278 = vpop.f32.mrb[0].mxu0
      %v1279 = vadd.f32 %v1162, %v1278
      %v1280 = vpop.f32.mrb[0].mxu0
      %v1281 = vpop.f32.mrb[0].mxu0
      %v1282 = vadd.f32 %v1162, %v1281
      %v1283 = vpop.f32.mrb[0].mxu0
      %1284 = vmatprep.mubr.bf16.mxu0 0
      %1285 = vmatmul.mubr.bf16.gmra.mrb[0].mxu0 %v1138
      %v1286 = vpop.f32.mrb[0].mxu0
      %v1287 = vadd.f32 %v1162, %v1286
      %v1288 = vpop.f32.mrb[0].mxu0
      %v1289 = vpop.f32.mrb[0].mxu0
      %v1290 = vadd.f32 %v1162, %v1289
      %v1291 = vpop.f32.mrb[0].mxu0
      %1292 = vmatprep.mubr.bf16.mxu0 0
      %1293 = vmatmul.mubr.bf16.gmra.mrb[0].mxu0 %v1139
      %v1294 = vpop.f32.mrb[0].mxu0
      %v1295 = vadd.f32 %v1162, %v1294
      %v1296 = vpop.f32.mrb[0].mxu0
      %v1297 = vpop.f32.mrb[0].mxu0
      %v1298 = vadd.f32 %v1162, %v1297
      %v1299 = vpop.f32.mrb[0].mxu0
      %1300 = vmatprep.mubr.bf16.mxu0 0
      %1301 = vmatmul.mubr.bf16.gmra.mrb[0].mxu0 %v1140
      %v1302 = vpop.f32.mrb[0].mxu0
      %v1303 = vadd.f32 %v1162, %v1302
      %v1304 = vpop.f32.mrb[0].mxu0
      %v1305 = vpop.f32.mrb[0].mxu0
      %v1306 = vadd.f32 %v1162, %v1305
      %v1307 = vpop.f32.mrb[0].mxu0
      %1308 = vdwg.mxu0
      %v1309 = vmax.f32 %v1247, 0.0
      %v1310 = vmax.f32 %v1250, 0.0
      %v1311 = vmax.f32 %v1255, 0.0
      %v1312 = vmax.f32 %v1258, 0.0
      %v1313 = vmax.f32 %v1263, 0.0
      %v1314 = vmax.f32 %v1266, 0.0
      %v1315 = vmax.f32 %v1271, 0.0
      %v1316 = vmax.f32 %v1274, 0.0
      %v1317 = vmax.f32 %v1279, 0.0
      %v1318 = vmax.f32 %v1282, 0.0
      %v1319 = vmax.f32 %v1287, 0.0
      %v1320 = vmax.f32 %v1290, 0.0
      %v1321 = vmax.f32 %v1295, 0.0
      %v1322 = vmax.f32 %v1298, 0.0
      %v1323 = vmax.f32 %v1303, 0.0
      %v1324 = vmax.f32 %v1306, 0.0
      %v1325 = vpack.c.bf16 %v1310, %v1309
      %v1326 = vpack.c.bf16 %v1312, %v1311
      %v1327 = vpack.c.bf16 %v1314, %v1313
      %v1328 = vpack.c.bf16 %v1316, %v1315
      %v1329 = vpack.c.bf16 %v1318, %v1317
      %v1330 = vpack.c.bf16 %v1320, %v1319
      %v1331 = vpack.c.bf16 %v1322, %v1321
      %v1332 = vpack.c.bf16 %v1324, %v1323
      %v1333 = vld [vmem:[%s9] sm:$0xf]
      %v1334 = vld [vmem:[%s9 + $0x4] sm:$0xf]
      %v1335 = vld [vmem:[%s9 + $0x8] sm:$0xf]
      %v1336 = vld [vmem:[%s9 + $0xc] sm:$0xf]
      %v1337 = vld [vmem:[%s9 + $0x10] sm:$0xf]
      %v1338 = vld [vmem:[%s9 + $0x14] sm:$0xf]
      %v1339 = vld [vmem:[%s9 + $0x18] sm:$0xf]
      %v1340 = vld [vmem:[%s9 + $0x1c] sm:$0xf]
      %v1341 = vld [vmem:[%s10] sm:$0x1]
      %v1343 = vlaneseq
      %v1344 = vshrl.u32 %v1343, 7
      %v1345 = vsub.s32 0, %v1344
      %v1346 = vrot.slane %v1341, %v1345
      %v1356 = vunpack.c.l.b16 %v1333
      %v1357 = vunpack.c.l.b16 %v1334
      %v1358 = vunpack.c.l.b16 %v1335
      %v1359 = vunpack.c.l.b16 %v1336
      %v1360 = vunpack.c.l.b16 %v1337
      %v1361 = vunpack.c.l.b16 %v1338
      %v1362 = vunpack.c.l.b16 %v1339
      %v1363 = vunpack.c.l.b16 %v1340
      %v1364 = vpack.c.b16 %v1357, %v1356
      %v1365 = vpack.c.b16 %v1359, %v1358
      %v1366 = vpack.c.b16 %v1361, %v1360
      %v1367 = vpack.c.b16 %v1363, %v1362
      %vm1372 = vcmask 523264
      %v1374 = vsel %vm1372, %v1325, 0
      %v1377 = vsel %vm1372, %v1326, 0
      %v1380 = vsel %vm1372, %v1327, 0
      %v1383 = vsel %vm1372, %v1328, 0
      %v1386 = vsel %vm1372, %v1329, 0
      %v1389 = vsel %vm1372, %v1330, 0
      %v1392 = vsel %vm1372, %v1331, 0
      %v1395 = vsel %vm1372, %v1332, 0
      %1397 = vmatprep.subr.bf16.mxu0 0
      %1398 = vmatpush1.bf16.msra.mxu0 %v1364
      %1399 = vmatprep.subr.bf16.mxu0 0
      %1400 = vmatpush1.bf16.msra.mxu0 %v1365
      %1401 = vmatprep.subr.bf16.mxu0 0
      %1402 = vmatpush1.bf16.msra.mxu0 %v1366
      %1403 = vmatprep.subr.bf16.mxu0 0
      %1404 = vmatpush1.bf16.msra.mxu0 %v1367
      %1405 = vmatprep.subr.bf16.mxu0 0
      %1406 = vmatpush1.bf16.msra.mxu0 0
      %1407 = vmatprep.subr.bf16.mxu0 0
      %1408 = vmatpush1.bf16.msra.mxu0 0
      %1409 = vmatprep.subr.bf16.mxu0 0
      %1410 = vmatpush1.bf16.msra.mxu0 0
      %1411 = vmatprep.subr.bf16.mxu0 0
      %1412 = vmatpush1.bf16.msra.mxu0 0
      %1413 = vmatprep.subr.bf16.mxu0 0
      %1414 = vmatpush1.bf16.msra.mxu0 0
      %1415 = vmatprep.subr.bf16.mxu0 0
      %1416 = vmatpush1.bf16.msra.mxu0 0
      %1417 = vmatprep.subr.bf16.mxu0 0
      %1418 = vmatpush1.bf16.msra.mxu0 0
      %1419 = vmatprep.subr.bf16.mxu0 0
      %1420 = vmatpush1.bf16.msra.mxu0 0
      %1421 = vmatprep.subr.bf16.mxu0 0
      %1422 = vmatpush1.bf16.msra.mxu0 0
      %1423 = vmatprep.subr.bf16.mxu0 0
      %1424 = vmatpush1.bf16.msra.mxu0 0
      %1425 = vmatprep.subr.bf16.mxu0 0
      %1426 = vmatpush1.bf16.msra.mxu0 0
      %1427 = vmatprep.subr.bf16.mxu0 0
      %1428 = vmatpush1.bf16.msra.mxu0 0
      %1429 = vmatprep.mubr.bf16.mxu0 0
      %1430 = vmatmul.mubr.bf16.gmra.mrb[0].mxu0 %v1374
      %v1431 = vpop.f32.mrb[0].mxu0
      %v1432 = vadd.f32 %v1346, %v1431
      %v1433 = vpop.f32.mrb[0].mxu0
      %v1434 = vpop.f32.mrb[0].mxu0
      %v1435 = vadd.f32 %v1346, %v1434
      %v1436 = vpop.f32.mrb[0].mxu0
      %1437 = vmatprep.mubr.bf16.mxu0 0
      %1438 = vmatmul.mubr.bf16.gmra.mrb[0].mxu0 %v1377
      %v1439 = vpop.f32.mrb[0].mxu0
      %v1440 = vadd.f32 %v1346, %v1439
      %v1441 = vpop.f32.mrb[0].mxu0
      %v1442 = vpop.f32.mrb[0].mxu0
      %v1443 = vadd.f32 %v1346, %v1442
      %v1444 = vpop.f32.mrb[0].mxu0
      %1445 = vmatprep.mubr.bf16.mxu0 0
      %1446 = vmatmul.mubr.bf16.gmra.mrb[0].mxu0 %v1380
      %v1447 = vpop.f32.mrb[0].mxu0
      %v1448 = vadd.f32 %v1346, %v1447
      %v1449 = vpop.f32.mrb[0].mxu0
      %v1450 = vpop.f32.mrb[0].mxu0
      %v1451 = vadd.f32 %v1346, %v1450
      %v1452 = vpop.f32.mrb[0].mxu0
      %1453 = vmatprep.mubr.bf16.mxu0 0
      %1454 = vmatmul.mubr.bf16.gmra.mrb[0].mxu0 %v1383
      %v1455 = vpop.f32.mrb[0].mxu0
      %v1456 = vadd.f32 %v1346, %v1455
      %v1457 = vpop.f32.mrb[0].mxu0
      %v1458 = vpop.f32.mrb[0].mxu0
      %v1459 = vadd.f32 %v1346, %v1458
      %v1460 = vpop.f32.mrb[0].mxu0
      %1461 = vmatprep.mubr.bf16.mxu0 0
      %1462 = vmatmul.mubr.bf16.gmra.mrb[0].mxu0 %v1386
      %v1463 = vpop.f32.mrb[0].mxu0
      %v1464 = vadd.f32 %v1346, %v1463
      %v1465 = vpop.f32.mrb[0].mxu0
      %v1466 = vpop.f32.mrb[0].mxu0
      %v1467 = vadd.f32 %v1346, %v1466
      %v1468 = vpop.f32.mrb[0].mxu0
      %1469 = vmatprep.mubr.bf16.mxu0 0
      %1470 = vmatmul.mubr.bf16.gmra.mrb[0].mxu0 %v1389
      %v1471 = vpop.f32.mrb[0].mxu0
      %v1472 = vadd.f32 %v1346, %v1471
      %v1473 = vpop.f32.mrb[0].mxu0
      %v1474 = vpop.f32.mrb[0].mxu0
      %v1475 = vadd.f32 %v1346, %v1474
      %v1476 = vpop.f32.mrb[0].mxu0
      %1477 = vmatprep.mubr.bf16.mxu0 0
      %1478 = vmatmul.mubr.bf16.gmra.mrb[0].mxu0 %v1392
      %v1479 = vpop.f32.mrb[0].mxu0
      %v1480 = vadd.f32 %v1346, %v1479
      %v1481 = vpop.f32.mrb[0].mxu0
      %v1482 = vpop.f32.mrb[0].mxu0
      %v1483 = vadd.f32 %v1346, %v1482
      %v1484 = vpop.f32.mrb[0].mxu0
      %1485 = vmatprep.mubr.bf16.mxu0 0
      %1486 = vmatmul.mubr.bf16.gmra.mrb[0].mxu0 %v1395
      %v1487 = vpop.f32.mrb[0].mxu0
      %v1488 = vadd.f32 %v1346, %v1487
      %v1489 = vpop.f32.mrb[0].mxu0
      %v1490 = vpop.f32.mrb[0].mxu0
      %v1491 = vadd.f32 %v1346, %v1490
      %v1492 = vpop.f32.mrb[0].mxu0
      %1493 = vdwg.mxu0
      %v1494 = vxor.u32 %v1432, 2147483648
      %v1495 = vxor.u32 %v1435, 2147483648
      %v1496 = vxor.u32 %v1440, 2147483648
      %v1497 = vxor.u32 %v1443, 2147483648
      %v1498 = vxor.u32 %v1448, 2147483648
      %v1499 = vxor.u32 %v1451, 2147483648
      %v1500 = vxor.u32 %v1456, 2147483648
      %v1501 = vxor.u32 %v1459, 2147483648
      %v1502 = vxor.u32 %v1464, 2147483648
      %v1503 = vxor.u32 %v1467, 2147483648
      %v1504 = vxor.u32 %v1472, 2147483648
      %v1505 = vxor.u32 %v1475, 2147483648
      %v1506 = vxor.u32 %v1480, 2147483648
      %v1507 = vxor.u32 %v1483, 2147483648
      %v1508 = vxor.u32 %v1488, 2147483648
      %v1509 = vxor.u32 %v1491, 2147483648
      %v1510 = vmul.f32 %v1494, 1.442695
      %v1511 = vpow.pop %v1510
      %v1512 = vmul.f32 %v1495, 1.442695
      %v1513 = vpow.pop %v1512
      %v1514 = vmul.f32 %v1496, 1.442695
      %v1515 = vpow.pop %v1514
      %v1516 = vmul.f32 %v1497, 1.442695
      %v1517 = vpow.pop %v1516
      %v1518 = vmul.f32 %v1498, 1.442695
      %v1519 = vpow.pop %v1518
      %v1520 = vmul.f32 %v1499, 1.442695
      %v1521 = vpow.pop %v1520
      %v1522 = vmul.f32 %v1500, 1.442695
      %v1523 = vpow.pop %v1522
      %v1524 = vmul.f32 %v1501, 1.442695
      %v1525 = vpow.pop %v1524
      %v1526 = vmul.f32 %v1502, 1.442695
      %v1527 = vpow.pop %v1526
      %v1528 = vmul.f32 %v1503, 1.442695
      %v1529 = vpow.pop %v1528
      %v1530 = vmul.f32 %v1504, 1.442695
      %v1531 = vpow.pop %v1530
      %v1532 = vmul.f32 %v1505, 1.442695
      %v1533 = vpow.pop %v1532
      %v1534 = vmul.f32 %v1506, 1.442695
      %v1535 = vpow.pop %v1534
      %v1536 = vmul.f32 %v1507, 1.442695
      %v1537 = vpow.pop %v1536
      %v1538 = vmul.f32 %v1508, 1.442695
      %v1539 = vpow.pop %v1538
      %v1540 = vmul.f32 %v1509, 1.442695
      %v1541 = vpow.pop %v1540
      %v1542 = vadd.f32 %v1511, 1.0
      %v1543 = vadd.f32 %v1513, 1.0
      %v1544 = vadd.f32 %v1515, 1.0
      %v1545 = vadd.f32 %v1517, 1.0
      %v1546 = vadd.f32 %v1519, 1.0
      %v1547 = vadd.f32 %v1521, 1.0
      %v1548 = vadd.f32 %v1523, 1.0
      %v1549 = vadd.f32 %v1525, 1.0
      %v1550 = vadd.f32 %v1527, 1.0
      %v1551 = vadd.f32 %v1529, 1.0
      %v1552 = vadd.f32 %v1531, 1.0
      %v1553 = vadd.f32 %v1533, 1.0
      %v1554 = vadd.f32 %v1535, 1.0
      %v1555 = vadd.f32 %v1537, 1.0
      %v1556 = vadd.f32 %v1539, 1.0
      %v1557 = vadd.f32 %v1541, 1.0
      %v1558 = vrcp.pop %v1542
      %v1559 = vmul.f32 1.0, %v1558
      %v1560 = vrcp.pop %v1543
      %v1561 = vmul.f32 1.0, %v1560
      %v1562 = vrcp.pop %v1544
      %v1563 = vmul.f32 1.0, %v1562
      %v1564 = vrcp.pop %v1545
      %v1565 = vmul.f32 1.0, %v1564
      %v1566 = vrcp.pop %v1546
      %v1567 = vmul.f32 1.0, %v1566
      %v1568 = vrcp.pop %v1547
      %v1569 = vmul.f32 1.0, %v1568
      %v1570 = vrcp.pop %v1548
      %v1571 = vmul.f32 1.0, %v1570
      %v1572 = vrcp.pop %v1549
      %v1573 = vmul.f32 1.0, %v1572
      %v1574 = vrcp.pop %v1550
      %v1575 = vmul.f32 1.0, %v1574
      %v1576 = vrcp.pop %v1551
      %v1577 = vmul.f32 1.0, %v1576
      %v1578 = vrcp.pop %v1552
      %v1579 = vmul.f32 1.0, %v1578
      %v1580 = vrcp.pop %v1553
      %v1581 = vmul.f32 1.0, %v1580
      %v1582 = vrcp.pop %v1554
      %v1583 = vmul.f32 1.0, %v1582
      %v1584 = vrcp.pop %v1555
      %v1585 = vmul.f32 1.0, %v1584
      %v1586 = vrcp.pop %v1556
      %v1587 = vmul.f32 1.0, %v1586
      %v1588 = vrcp.pop %v1557
      %v1589 = vmul.f32 1.0, %v1588
      %v1590 = vpack.c.bf16 %v1561, %v1559
      %v1591 = vpack.c.bf16 %v1565, %v1563
      %v1592 = vpack.c.bf16 %v1569, %v1567
      %v1593 = vpack.c.bf16 %v1573, %v1571
      %v1594 = vpack.c.bf16 %v1577, %v1575
      %v1595 = vpack.c.bf16 %v1581, %v1579
      %v1596 = vpack.c.bf16 %v1585, %v1583
      %v1597 = vpack.c.bf16 %v1589, %v1587
      %v1606 = vunpack.c.l.b16 %v1590
      %v1607 = vunpack.c.h.b16 %v1590
      %v1608 = vunpack.c.l.b16 %v1591
      %v1609 = vunpack.c.h.b16 %v1591
      %v1610 = vunpack.c.l.b16 %v1592
      %v1611 = vunpack.c.h.b16 %v1592
      %v1612 = vunpack.c.l.b16 %v1593
      %v1613 = vunpack.c.h.b16 %v1593
      %v1614 = vunpack.c.l.b16 %v1594
      %v1615 = vunpack.c.h.b16 %v1594
      %v1616 = vunpack.c.l.b16 %v1595
      %v1617 = vunpack.c.h.b16 %v1595
      %v1618 = vunpack.c.l.b16 %v1596
      %v1619 = vunpack.c.h.b16 %v1596
      %v1620 = vunpack.c.l.b16 %v1597
      %v1621 = vunpack.c.h.b16 %v1597
      %v1622 = vpack.c.b16 %v1606, %v1606
      %v1623 = vpack.c.b16 %v1607, %v1607
      %v1624 = vpack.c.b16 %v1608, %v1608
      %v1625 = vpack.c.b16 %v1609, %v1609
      %v1626 = vpack.c.b16 %v1610, %v1610
      %v1627 = vpack.c.b16 %v1611, %v1611
      %v1628 = vpack.c.b16 %v1612, %v1612
      %v1629 = vpack.c.b16 %v1613, %v1613
      %v1630 = vpack.c.b16 %v1614, %v1614
      %v1631 = vpack.c.b16 %v1615, %v1615
      %v1632 = vpack.c.b16 %v1616, %v1616
      %v1633 = vpack.c.b16 %v1617, %v1617
      %v1634 = vpack.c.b16 %v1618, %v1618
      %v1635 = vpack.c.b16 %v1619, %v1619
      %v1636 = vpack.c.b16 %v1620, %v1620
      %v1637 = vpack.c.b16 %v1621, %v1621
      %vm1654 = vcmask 60416
      %1655 = vst.msk [vmem:[%s388] sm:$0xf] %vm1654, %v1622
      %1656 = vst.msk [vmem:[%s388 + $0x4] sm:$0xf] %vm1654, %v1623
      %1657 = vst.msk [vmem:[%s388 + $0x8] sm:$0xf] %vm1654, %v1624
      %1658 = vst.msk [vmem:[%s388 + $0xc] sm:$0xf] %vm1654, %v1625
      %1659 = vst.msk [vmem:[%s388 + $0x10] sm:$0xf] %vm1654, %v1626
      %1660 = vst.msk [vmem:[%s388 + $0x14] sm:$0xf] %vm1654, %v1627
      %1661 = vst.msk [vmem:[%s388 + $0x18] sm:$0xf] %vm1654, %v1628
      %1662 = vst.msk [vmem:[%s388 + $0x1c] sm:$0xf] %vm1654, %v1629
      %1663 = vst.msk [vmem:[%s388 + $0x20] sm:$0xf] %vm1654, %v1630
      %1664 = vst.msk [vmem:[%s388 + $0x24] sm:$0xf] %vm1654, %v1631
      %1665 = vst.msk [vmem:[%s388 + $0x28] sm:$0xf] %vm1654, %v1632
      %1666 = vst.msk [vmem:[%s388 + $0x2c] sm:$0xf] %vm1654, %v1633
      %1667 = vst.msk [vmem:[%s388 + $0x30] sm:$0xf] %vm1654, %v1634
      %1668 = vst.msk [vmem:[%s388 + $0x34] sm:$0xf] %vm1654, %v1635
      %1669 = vst.msk [vmem:[%s388 + $0x38] sm:$0xf] %vm1654, %v1636
      %1670 = vst.msk [vmem:[%s388 + $0x3c] sm:$0xf] %vm1654, %v1637
      %s1671 = smul.u32 16, %s22
      %p1672 = scmp.lt.s32.totalorder %s1671, 31
      %s1673 = scalar_select %p1672, %s1671, 31
      %s1674 = smul.addr %s1673, 4
      %s1675 = scalar_lea.vmem %s11, %s1674
      // Predicated region
      $region65: #{tpu_custom_call.1} parent=63 // pred_check
        %p1676 = pneg %p276
      $region66: #{tpu_custom_call.1} parent=63 // pred_check_branch
        %1678 = sbr.rel (%p1676) target = $region68
      $region67: #{tpu_custom_call.1} parent=63 // pred_region
        %s1679 = smul.u32 16, %s22
      $region68: #{tpu_custom_call.1} parent=63 // pred_fallthru
        _
    $region64: #{tpu_custom_call.1} parent=5 // pred_fallthru
      _
    %p1680 = scmp.le.s32.totalorder 2, %s17
    // Predicated region
    $region69: #{tpu_custom_call.1} parent=5 // pred_check
      %p1681 = pneg %p1680
    $region70: #{tpu_custom_call.1} parent=5 // pred_check_branch
      %1683 = sbr.rel (%p1681) target = $region72
    $region71: #{tpu_custom_call.1} parent=5 // pred_region
      %s1684 = ssub.s32 %s17, 2
      // Predicated region
      $region73: #{tpu_custom_call.1} parent=71 // pred_check
        %p1685 = pneg %p282
      $region74: #{tpu_custom_call.1} parent=71 // pred_check_branch
        %1687 = sbr.rel (%p1685) target = $region76
      $region75: #{tpu_custom_call.1} parent=71 // pred_region
        %s1688 = smul.u32 16, %s23
        %p1689 = scmp.lt.s32.totalorder %s1688, 31
        %s1690 = scalar_select %p1689, %s1688, 31
        %s1691 = smul.addr %s1690, 4
        %s1692 = scalar_lea.vmem %s11, %s1691
      $region76: #{tpu_custom_call.1} parent=71 // pred_fallthru
        _
    $region72: #{tpu_custom_call.1} parent=5 // pred_fallthru
      _
  $region6: #{tpu_custom_call.1} parent=0 // loop_footer
    %s21 = sadd.s32 1, %s17
  $region7: #{tpu_custom_call.1} parent=0 // loop_footer_branch
    %16 = sbr.rel target = $region3
  $region8: #{tpu_custom_call.1} parent=0 // loop_exit
    _

</llo_original>
